<compile_context>
chip_gen: v7x
topology: tpu7x:2x2x1
jax: 0.10.0
libtpu: 0.0.40
codegen_flags: <defaults>
</compile_context>

<pallas_src>
import functools

import jax
import jax.numpy as jnp
from jax.experimental import pallas as pl
from jax.experimental.pallas import tpu as pltpu

LANE = 128
SUBLANE = 8


def _round_up(x, m):
    return (x + m - 1) // m * m


def _pad2d(x, rows, cols):
    r, c = x.shape
    return jnp.pad(x, ((0, rows - r), (0, cols - c)))


def _pad_row(v, cols):
    v = v.reshape(1, -1)
    return jnp.pad(v, ((0, 0), (0, cols - v.shape[1])))


# ----------------------------------------------------------------------------
# Fused forward kernel
#   for each GIN layer:  h = MLP((1+eps)*h + A@h)   (+ outer ReLU except last)
#   d  = sel @ h                      (in-kernel pair gather, [2B, H])
#   y  = tr(d)                        (BN folded into weights, run once on stack)
#   comb = y[:B] * y[B:]              (comb_type='prod_fc')
#   out  = fc2( relu( fc1(comb) ) )   (BN folded into fc1)
# ----------------------------------------------------------------------------
def _comb_gnn_kernel(a_ref, h_ref, sel_ref,
                     cw1_ref, cb1_ref, cw2_ref, cb2_ref,
                     tw1_ref, tsh1_ref, tw2_ref, tsh2_ref,
                     fw1_ref, fsh1_ref, fw2_ref, fb2_ref,
                     o_ref, *, nlayers, eps):
    def mm(x, w_bf16):
        # bf16 MXU inputs, f32 accumulation.
        return jnp.dot(x.astype(jnp.bfloat16), w_bf16,
                       preferred_element_type=jnp.float32)

    a = a_ref[...]          # bf16 [Np, Np] (exact: small integer edge counts)
    h = h_ref[...]          # f32  [Np, Hp]

    for li in range(nlayers):                      # static unrolled layer loop
        agg = jnp.dot(a, h.astype(jnp.bfloat16),
                      preferred_element_type=jnp.float32)
        z = h + agg if eps == 0.0 else (1.0 + eps) * h + agg
        z = jnp.maximum(mm(z, cw1_ref[li]) + cb1_ref[li], 0.0)
        z = mm(z, cw2_ref[li]) + cb2_ref[li]
        h = jnp.maximum(z, 0.0) if li < nlayers - 1 else z

    # pair gather as one-hot selection matmul: [2B, Np] @ [Np, Hp] -> [2B, Hp]
    d = jnp.dot(sel_ref[...], h.astype(jnp.bfloat16),
                preferred_element_type=jnp.float32)

    # tr() once on the stacked [2B, Hp]; BN + bias folded into weight / shift.
    y = jnp.maximum(mm(d, tw1_ref[...]) + tsh1_ref[...], 0.0)
    y = mm(y, tw2_ref[...]) + tsh2_ref[...]

    b = o_ref.shape[0]
    comb = y[:b, :] * y[b:, :]                     # prod_fc combination

    z = jnp.maximum(mm(comb, fw1_ref[...]) + fsh1_ref[...], 0.0)
    o_ref[...] = (mm(z, fw2_ref[...]) + fb2_ref[...]).astype(o_ref.dtype)


# ----------------------------------------------------------------------------
# Wrapper: embedding lookup, dense adjacency, one-hot pair selection, padding
# and BN folding are trace-time glue; one pallas_call runs the hot path.
# ----------------------------------------------------------------------------
def comb_gnn_forward(params, x_idx, edge_index, edge_label_index, num_nodes,
                     hidden_dim, output_dim, eps=0.0):
    f32, bf16 = jnp.float32, jnp.bfloat16
    nlayers = len(params["convs"])
    npairs = edge_label_index.shape[1]

    n_pad = _round_up(max(num_nodes, SUBLANE), LANE)   # lane-dense adjacency / sel
    h_pad = _round_up(hidden_dim, LANE)
    o_pad = _round_up(output_dim, LANE)
    b_pad = _round_up(max(npairs, SUBLANE), SUBLANE)

    # glue: embedding gather, dense adjacency (A[i,j] = #edges j->i), one-hot sel
    h0 = _pad2d(params["embedding"][x_idx].astype(f32), n_pad, h_pad)
    src, dst = edge_index[0], edge_index[1]
    adj = jnp.zeros((n_pad, n_pad), f32).at[dst, src].add(1.0).astype(bf16)
    sel1 = _pad2d(jax.nn.one_hot(edge_label_index[0], n_pad, dtype=f32), b_pad, n_pad)
    sel2 = _pad2d(jax.nn.one_hot(edge_label_index[1], n_pad, dtype=f32), b_pad, n_pad)
    sel = jnp.concatenate([sel1, sel2], axis=0).astype(bf16)   # [2*b_pad, n_pad]

    # GIN MLP weights, stacked per layer, padded and pre-cast to bf16
    cw1 = jnp.stack([_pad2d(w1, h_pad, h_pad) for (w1, _, _, _) in params["convs"]]).astype(bf16)
    cb1 = jnp.stack([_pad_row(b1, h_pad) for (_, b1, _, _) in params["convs"]]).astype(f32)
    cw2 = jnp.stack([_pad2d(w2, h_pad, h_pad) for (_, _, w2, _) in params["convs"]]).astype(bf16)
    cb2 = jnp.stack([_pad_row(b2, h_pad) for (_, _, _, b2) in params["convs"]]).astype(f32)

    # fold eval-mode BatchNorm (and linear bias) into weight scale + shift
    def fold_bn(w, b, g, be, m, v):
        s = g * jax.lax.rsqrt(v + 1e-5)
        return w * s[None, :], (b - m) * s + be

    (tw1, tb1, tg1, tbe1, tm1, tv1, tw2, tb2, tg2, tbe2, tm2, tv2) = params["tr"]
    (fw1, fb1, fg1, fbe1, fm1, fv1, fw2, fb2) = params["fc"]
    tw1f, tsh1 = fold_bn(tw1, tb1, tg1, tbe1, tm1, tv1)
    tw2f, tsh2 = fold_bn(tw2, tb2, tg2, tbe2, tm2, tv2)
    fw1f, fsh1 = fold_bn(fw1, fb1, fg1, fbe1, fm1, fv1)

    args = (
        adj, h0, sel,
        cw1, cb1, cw2, cb2,
        _pad2d(tw1f, h_pad, h_pad).astype(bf16), _pad_row(tsh1, h_pad),
        _pad2d(tw2f, h_pad, h_pad).astype(bf16), _pad_row(tsh2, h_pad),
        _pad2d(fw1f, h_pad, h_pad).astype(bf16), _pad_row(fsh1, h_pad),
        _pad2d(fw2, h_pad, o_pad).astype(bf16), _pad_row(fb2, o_pad),
    )

    vmem = pl.BlockSpec(memory_space=pltpu.MemorySpace.VMEM)
    kernel = functools.partial(_comb_gnn_kernel, nlayers=nlayers, eps=eps)
    out = pl.pallas_call(
        kernel,
        out_shape=jax.ShapeDtypeStruct((b_pad, o_pad), f32),
        in_specs=[vmem] * len(args),
        out_specs=vmem,
    )(*args)
    return out[:npairs, :output_dim]


# ----------------------------------------------------------------------------
# Pure-JAX reference (f32, unfolded) to validate the fused kernel
# ----------------------------------------------------------------------------
def reference_forward(params, x_idx, edge_index, edge_label_index, num_nodes,
                      output_dim):
    h = params["embedding"][x_idx]
    src, dst = edge_index[0], edge_index[1]
    adj = jnp.zeros((num_nodes, num_nodes), jnp.float32).at[dst, src].add(1.0)
    nlayers = len(params["convs"])
    for li, (w1, b1, w2, b2) in enumerate(params["convs"]):
        agg = adj @ h
        t = h + agg
        t = jnp.maximum(t @ w1 + b1, 0.0) @ w2 + b2
        h = jnp.maximum(t, 0.0) if li < nlayers - 1 else t

    def bn(y, g, be, m, v):
        return (y - m) * g / jnp.sqrt(v + 1e-5) + be

    (tw1, tb1, tg1, tbe1, tm1, tv1, tw2, tb2, tg2, tbe2, tm2, tv2) = params["tr"]
    (fw1, fb1, fg1, fbe1, fm1, fv1, fw2, fb2) = params["fc"]

    def tr(x):
        y = bn(x @ tw1 + tb1, tg1, tbe1, tm1, tv1)
        y = jnp.maximum(y, 0.0)
        return bn(y @ tw2 + tb2, tg2, tbe2, tm2, tv2)

    d1 = tr(h[edge_label_index[0]])
    d2 = tr(h[edge_label_index[1]])
    comb = d1 * d2
    z = jnp.maximum(bn(comb @ fw1 + fb1, fg1, fbe1, fm1, fv1), 0.0)
    return z @ fw2 + fb2


# ----------------------------------------------------------------------------
# Deterministic parameter init (PyTorch-like uniform fan-in init)
# ----------------------------------------------------------------------------
def init_params(key, num_nodes, hidden_dim, output_dim, nlayers):
    def linear(k, fan_in, fan_out):
        kw, kb = jax.random.split(k)
        bound = 1.0 / jnp.sqrt(fan_in)
        w = jax.random.uniform(kw, (fan_in, fan_out), jnp.float32, -bound, bound)
        b = jax.random.uniform(kb, (fan_out,), jnp.float32, -bound, bound)
        return w, b

    def bn(k, dim):
        k1, k2, k3, k4 = jax.random.split(k, 4)
        gamma = jax.random.uniform(k1, (dim,), jnp.float32, 0.5, 1.5)
        beta = 0.1 * jax.random.normal(k2, (dim,), jnp.float32)
        mean = 0.1 * jax.random.normal(k3, (dim,), jnp.float32)
        var = jax.random.uniform(k4, (dim,), jnp.float32, 0.5, 1.5)
        return gamma, beta, mean, var

    keys = jax.random.split(key, 3 + nlayers)
    params = {}
    params["embedding"] = jax.random.normal(keys[0], (num_nodes, hidden_dim),
                                            jnp.float32)
    convs = []
    for li in range(nlayers):
        k1, k2 = jax.random.split(keys[1 + li])
        w1, b1 = linear(k1, hidden_dim, hidden_dim)
        w2, b2 = linear(k2, hidden_dim, hidden_dim)
        convs.append((w1, b1, w2, b2))
    params["convs"] = convs

    kt = jax.random.split(keys[1 + nlayers], 4)
    tw1, tb1 = linear(kt[0], hidden_dim, hidden_dim)
    tg1, tbe1, tm1, tv1 = bn(kt[1], hidden_dim)
    tw2, tb2 = linear(kt[2], hidden_dim, hidden_dim)
    tg2, tbe2, tm2, tv2 = bn(kt[3], hidden_dim)
    params["tr"] = (tw1, tb1, tg1, tbe1, tm1, tv1,
                    tw2, tb2, tg2, tbe2, tm2, tv2)

    kf = jax.random.split(keys[2 + nlayers], 3)
    fw1, fb1 = linear(kf[0], hidden_dim, hidden_dim)
    fg1, fbe1, fm1, fv1 = bn(kf[1], hidden_dim)
    fw2, fb2 = linear(kf[2], hidden_dim, output_dim)
    params["fc"] = (fw1, fb1, fg1, fbe1, fm1, fv1, fw2, fb2)
    return params


if __name__ == "__main__":
    num_nodes = 64
    hidden_dim = 32
    output_dim = 8
    nlayers = 2
    num_edges = 128
    num_pairs = 16

    key = jax.random.PRNGKey(0)
    kp, ke, kl = jax.random.split(key, 3)

    params = init_params(kp, num_nodes, hidden_dim, output_dim, nlayers)

    x_idx = jnp.arange(num_nodes, dtype=jnp.int32)  # node indices into Embedding
    edge_index = jax.random.randint(ke, (2, num_edges), 0, num_nodes,
                                    dtype=jnp.int32)
    edge_label_index = jax.random.randint(kl, (2, num_pairs), 0, num_nodes,
                                          dtype=jnp.int32)

    out = comb_gnn_forward(params, x_idx, edge_index, edge_label_index,
                           num_nodes, hidden_dim, output_dim)
    out = jax.block_until_ready(out)

    ref = reference_forward(params, x_idx, edge_index, edge_label_index,
                            num_nodes, output_dim)
    ref = jax.block_until_ready(ref)

    assert out.shape == (num_pairs, output_dim)
    # Kernel uses bf16 MXU inputs with f32 accumulation (standard TPU matmul
    # numerics); tolerance reflects bf16-level agreement with the f32 reference.
    assert jnp.allclose(out, ref, atol=5e-2, rtol=5e-2), "mismatch vs reference"
    print("KERNEL_OK")
</pallas_src>

<mosaic_0001>
module attributes {stable_mosaic.version = 11 : i64} {
  func.func @_comb_gnn_kernel(%arg0: memref<128x128xbf16, #tpu.memory_space<vmem>>, %arg1: memref<128x128xf32, #tpu.memory_space<vmem>>, %arg2: memref<32x128xbf16, #tpu.memory_space<vmem>>, %arg3: memref<2x128x128xbf16, #tpu.memory_space<vmem>>, %arg4: memref<2x1x128xf32, #tpu.memory_space<vmem>>, %arg5: memref<2x128x128xbf16, #tpu.memory_space<vmem>>, %arg6: memref<2x1x128xf32, #tpu.memory_space<vmem>>, %arg7: memref<128x128xbf16, #tpu.memory_space<vmem>>, %arg8: memref<1x128xf32, #tpu.memory_space<vmem>>, %arg9: memref<128x128xbf16, #tpu.memory_space<vmem>>, %arg10: memref<1x128xf32, #tpu.memory_space<vmem>>, %arg11: memref<128x128xbf16, #tpu.memory_space<vmem>>, %arg12: memref<1x128xf32, #tpu.memory_space<vmem>>, %arg13: memref<128x128xbf16, #tpu.memory_space<vmem>>, %arg14: memref<1x128xf32, #tpu.memory_space<vmem>>, %arg15: memref<16x128xf32, #tpu.memory_space<vmem>>) attributes {dimension_semantics = [], scalar_prefetch = 0 : i64, scratch_operands = 0 : i64, tpu.core_type = #tpu.core_type<tc>} {
    %c0 = arith.constant 0 : index
    %c0_0 = arith.constant 0 : index
    %0 = vector.load %arg0[%c0, %c0_0] : memref<128x128xbf16, #tpu.memory_space<vmem>>, vector<128x128xbf16>
    %c0_1 = arith.constant 0 : index
    %c0_2 = arith.constant 0 : index
    %1 = vector.load %arg1[%c0_1, %c0_2] : memref<128x128xf32, #tpu.memory_space<vmem>>, vector<128x128xf32>
    %2 = arith.truncf %1 : vector<128x128xf32> to vector<128x128xbf16>
    %cst = arith.constant dense<0.000000e+00> : vector<128x128xf32>
    %3 = tpu.matmul %0, %2, %cst {dimension_numbers = #tpu.dot_dimension_numbers<[1], [0], [0], [1], [0, 0, 1, 1], [], []>} : vector<128x128xbf16>, vector<128x128xbf16>, vector<128x128xf32> -> vector<128x128xf32>
    %4 = arith.addf %1, %3 : vector<128x128xf32>
    %c0_3 = arith.constant 0 : index
    %c0_4 = arith.constant 0 : index
    %c0_5 = arith.constant 0 : index
    %5 = vector.load %arg3[%c0_3, %c0_4, %c0_5] : memref<2x128x128xbf16, #tpu.memory_space<vmem>>, vector<1x128x128xbf16>
    %6 = vector.shape_cast %5 : vector<1x128x128xbf16> to vector<128x128xbf16>
    %7 = arith.truncf %4 : vector<128x128xf32> to vector<128x128xbf16>
    %cst_6 = arith.constant dense<0.000000e+00> : vector<128x128xf32>
    %8 = tpu.matmul %7, %6, %cst_6 {dimension_numbers = #tpu.dot_dimension_numbers<[1], [0], [0], [1], [0, 0, 1, 1], [], []>} : vector<128x128xbf16>, vector<128x128xbf16>, vector<128x128xf32> -> vector<128x128xf32>
    %c0_7 = arith.constant 0 : index
    %c0_8 = arith.constant 0 : index
    %c0_9 = arith.constant 0 : index
    %9 = vector.load %arg4[%c0_7, %c0_8, %c0_9] : memref<2x1x128xf32, #tpu.memory_space<vmem>>, vector<1x1x128xf32>
    %10 = vector.shape_cast %9 : vector<1x1x128xf32> to vector<1x128xf32>
    %11 = vector.broadcast %10 : vector<1x128xf32> to vector<128x128xf32>
    %12 = arith.addf %8, %11 : vector<128x128xf32>
    %cst_10 = arith.constant 0.000000e+00 : f32
    %13 = vector.broadcast %cst_10 : f32 to vector<128x128xf32>
    %14 = arith.maximumf %12, %13 : vector<128x128xf32>
    %c0_11 = arith.constant 0 : index
    %c0_12 = arith.constant 0 : index
    %c0_13 = arith.constant 0 : index
    %15 = vector.load %arg5[%c0_11, %c0_12, %c0_13] : memref<2x128x128xbf16, #tpu.memory_space<vmem>>, vector<1x128x128xbf16>
    %16 = vector.shape_cast %15 : vector<1x128x128xbf16> to vector<128x128xbf16>
    %17 = arith.truncf %14 : vector<128x128xf32> to vector<128x128xbf16>
    %cst_14 = arith.constant dense<0.000000e+00> : vector<128x128xf32>
    %18 = tpu.matmul %17, %16, %cst_14 {dimension_numbers = #tpu.dot_dimension_numbers<[1], [0], [0], [1], [0, 0, 1, 1], [], []>} : vector<128x128xbf16>, vector<128x128xbf16>, vector<128x128xf32> -> vector<128x128xf32>
    %c0_15 = arith.constant 0 : index
    %c0_16 = arith.constant 0 : index
    %c0_17 = arith.constant 0 : index
    %19 = vector.load %arg6[%c0_15, %c0_16, %c0_17] : memref<2x1x128xf32, #tpu.memory_space<vmem>>, vector<1x1x128xf32>
    %20 = vector.shape_cast %19 : vector<1x1x128xf32> to vector<1x128xf32>
    %21 = vector.broadcast %20 : vector<1x128xf32> to vector<128x128xf32>
    %22 = arith.addf %18, %21 : vector<128x128xf32>
    %cst_18 = arith.constant 0.000000e+00 : f32
    %23 = vector.broadcast %cst_18 : f32 to vector<128x128xf32>
    %24 = arith.maximumf %22, %23 : vector<128x128xf32>
    %25 = arith.truncf %24 : vector<128x128xf32> to vector<128x128xbf16>
    %cst_19 = arith.constant dense<0.000000e+00> : vector<128x128xf32>
    %26 = tpu.matmul %0, %25, %cst_19 {dimension_numbers = #tpu.dot_dimension_numbers<[1], [0], [0], [1], [0, 0, 1, 1], [], []>} : vector<128x128xbf16>, vector<128x128xbf16>, vector<128x128xf32> -> vector<128x128xf32>
    %27 = arith.addf %24, %26 : vector<128x128xf32>
    %c1 = arith.constant 1 : index
    %c0_20 = arith.constant 0 : index
    %c0_21 = arith.constant 0 : index
    %28 = vector.load %arg3[%c1, %c0_20, %c0_21] : memref<2x128x128xbf16, #tpu.memory_space<vmem>>, vector<1x128x128xbf16>
    %29 = vector.shape_cast %28 : vector<1x128x128xbf16> to vector<128x128xbf16>
    %30 = arith.truncf %27 : vector<128x128xf32> to vector<128x128xbf16>
    %cst_22 = arith.constant dense<0.000000e+00> : vector<128x128xf32>
    %31 = tpu.matmul %30, %29, %cst_22 {dimension_numbers = #tpu.dot_dimension_numbers<[1], [0], [0], [1], [0, 0, 1, 1], [], []>} : vector<128x128xbf16>, vector<128x128xbf16>, vector<128x128xf32> -> vector<128x128xf32>
    %c1_23 = arith.constant 1 : index
    %c0_24 = arith.constant 0 : index
    %c0_25 = arith.constant 0 : index
    %32 = vector.load %arg4[%c1_23, %c0_24, %c0_25] : memref<2x1x128xf32, #tpu.memory_space<vmem>>, vector<1x1x128xf32>
    %33 = vector.shape_cast %32 : vector<1x1x128xf32> to vector<1x128xf32>
    %34 = vector.broadcast %33 : vector<1x128xf32> to vector<128x128xf32>
    %35 = arith.addf %31, %34 : vector<128x128xf32>
    %cst_26 = arith.constant 0.000000e+00 : f32
    %36 = vector.broadcast %cst_26 : f32 to vector<128x128xf32>
    %37 = arith.maximumf %35, %36 : vector<128x128xf32>
    %c1_27 = arith.constant 1 : index
    %c0_28 = arith.constant 0 : index
    %c0_29 = arith.constant 0 : index
    %38 = vector.load %arg5[%c1_27, %c0_28, %c0_29] : memref<2x128x128xbf16, #tpu.memory_space<vmem>>, vector<1x128x128xbf16>
    %39 = vector.shape_cast %38 : vector<1x128x128xbf16> to vector<128x128xbf16>
    %40 = arith.truncf %37 : vector<128x128xf32> to vector<128x128xbf16>
    %cst_30 = arith.constant dense<0.000000e+00> : vector<128x128xf32>
    %41 = tpu.matmul %40, %39, %cst_30 {dimension_numbers = #tpu.dot_dimension_numbers<[1], [0], [0], [1], [0, 0, 1, 1], [], []>} : vector<128x128xbf16>, vector<128x128xbf16>, vector<128x128xf32> -> vector<128x128xf32>
    %c1_31 = arith.constant 1 : index
    %c0_32 = arith.constant 0 : index
    %c0_33 = arith.constant 0 : index
    %42 = vector.load %arg6[%c1_31, %c0_32, %c0_33] : memref<2x1x128xf32, #tpu.memory_space<vmem>>, vector<1x1x128xf32>
    %43 = vector.shape_cast %42 : vector<1x1x128xf32> to vector<1x128xf32>
    %44 = vector.broadcast %43 : vector<1x128xf32> to vector<128x128xf32>
    %45 = arith.addf %41, %44 : vector<128x128xf32>
    %c0_34 = arith.constant 0 : index
    %c0_35 = arith.constant 0 : index
    %46 = vector.load %arg2[%c0_34, %c0_35] : memref<32x128xbf16, #tpu.memory_space<vmem>>, vector<32x128xbf16>
    %47 = arith.truncf %45 : vector<128x128xf32> to vector<128x128xbf16>
    %cst_36 = arith.constant dense<0.000000e+00> : vector<32x128xf32>
    %48 = tpu.matmul %46, %47, %cst_36 {dimension_numbers = #tpu.dot_dimension_numbers<[1], [0], [0], [1], [0, 0, 1, 1], [], []>} : vector<32x128xbf16>, vector<128x128xbf16>, vector<32x128xf32> -> vector<32x128xf32>
    %c0_37 = arith.constant 0 : index
    %c0_38 = arith.constant 0 : index
    %49 = vector.load %arg7[%c0_37, %c0_38] : memref<128x128xbf16, #tpu.memory_space<vmem>>, vector<128x128xbf16>
    %50 = arith.truncf %48 : vector<32x128xf32> to vector<32x128xbf16>
    %cst_39 = arith.constant dense<0.000000e+00> : vector<32x128xf32>
    %51 = tpu.matmul %50, %49, %cst_39 {dimension_numbers = #tpu.dot_dimension_numbers<[1], [0], [0], [1], [0, 0, 1, 1], [], []>} : vector<32x128xbf16>, vector<128x128xbf16>, vector<32x128xf32> -> vector<32x128xf32>
    %c0_40 = arith.constant 0 : index
    %c0_41 = arith.constant 0 : index
    %52 = vector.load %arg8[%c0_40, %c0_41] : memref<1x128xf32, #tpu.memory_space<vmem>>, vector<1x128xf32>
    %53 = vector.broadcast %52 : vector<1x128xf32> to vector<32x128xf32>
    %54 = arith.addf %51, %53 : vector<32x128xf32>
    %cst_42 = arith.constant 0.000000e+00 : f32
    %55 = vector.broadcast %cst_42 : f32 to vector<32x128xf32>
    %56 = arith.maximumf %54, %55 : vector<32x128xf32>
    %c0_43 = arith.constant 0 : index
    %c0_44 = arith.constant 0 : index
    %57 = vector.load %arg9[%c0_43, %c0_44] : memref<128x128xbf16, #tpu.memory_space<vmem>>, vector<128x128xbf16>
    %58 = arith.truncf %56 : vector<32x128xf32> to vector<32x128xbf16>
    %cst_45 = arith.constant dense<0.000000e+00> : vector<32x128xf32>
    %59 = tpu.matmul %58, %57, %cst_45 {dimension_numbers = #tpu.dot_dimension_numbers<[1], [0], [0], [1], [0, 0, 1, 1], [], []>} : vector<32x128xbf16>, vector<128x128xbf16>, vector<32x128xf32> -> vector<32x128xf32>
    %c0_46 = arith.constant 0 : index
    %c0_47 = arith.constant 0 : index
    %60 = vector.load %arg10[%c0_46, %c0_47] : memref<1x128xf32, #tpu.memory_space<vmem>>, vector<1x128xf32>
    %61 = vector.broadcast %60 : vector<1x128xf32> to vector<32x128xf32>
    %62 = arith.addf %59, %61 : vector<32x128xf32>
    %63 = vector.extract_strided_slice %62 {offsets = [0, 0], sizes = [16, 128], strides = [1, 1]} : vector<32x128xf32> to vector<16x128xf32>
    %64 = vector.extract_strided_slice %62 {offsets = [16, 0], sizes = [16, 128], strides = [1, 1]} : vector<32x128xf32> to vector<16x128xf32>
    %65 = arith.mulf %63, %64 : vector<16x128xf32>
    %c0_48 = arith.constant 0 : index
    %c0_49 = arith.constant 0 : index
    %66 = vector.load %arg11[%c0_48, %c0_49] : memref<128x128xbf16, #tpu.memory_space<vmem>>, vector<128x128xbf16>
    %67 = arith.truncf %65 : vector<16x128xf32> to vector<16x128xbf16>
    %cst_50 = arith.constant dense<0.000000e+00> : vector<16x128xf32>
    %68 = tpu.matmul %67, %66, %cst_50 {dimension_numbers = #tpu.dot_dimension_numbers<[1], [0], [0], [1], [0, 0, 1, 1], [], []>} : vector<16x128xbf16>, vector<128x128xbf16>, vector<16x128xf32> -> vector<16x128xf32>
    %c0_51 = arith.constant 0 : index
    %c0_52 = arith.constant 0 : index
    %69 = vector.load %arg12[%c0_51, %c0_52] : memref<1x128xf32, #tpu.memory_space<vmem>>, vector<1x128xf32>
    %70 = vector.broadcast %69 : vector<1x128xf32> to vector<16x128xf32>
    %71 = arith.addf %68, %70 : vector<16x128xf32>
    %cst_53 = arith.constant 0.000000e+00 : f32
    %72 = vector.broadcast %cst_53 : f32 to vector<16x128xf32>
    %73 = arith.maximumf %71, %72 : vector<16x128xf32>
    %c0_54 = arith.constant 0 : index
    %c0_55 = arith.constant 0 : index
    %74 = vector.load %arg13[%c0_54, %c0_55] : memref<128x128xbf16, #tpu.memory_space<vmem>>, vector<128x128xbf16>
    %75 = arith.truncf %73 : vector<16x128xf32> to vector<16x128xbf16>
    %cst_56 = arith.constant dense<0.000000e+00> : vector<16x128xf32>
    %76 = tpu.matmul %75, %74, %cst_56 {dimension_numbers = #tpu.dot_dimension_numbers<[1], [0], [0], [1], [0, 0, 1, 1], [], []>} : vector<16x128xbf16>, vector<128x128xbf16>, vector<16x128xf32> -> vector<16x128xf32>
    %c0_57 = arith.constant 0 : index
    %c0_58 = arith.constant 0 : index
    %77 = vector.load %arg14[%c0_57, %c0_58] : memref<1x128xf32, #tpu.memory_space<vmem>>, vector<1x128xf32>
    %78 = vector.broadcast %77 : vector<1x128xf32> to vector<16x128xf32>
    %79 = arith.addf %76, %78 : vector<16x128xf32>
    %c0_59 = arith.constant 0 : index
    %c0_60 = arith.constant 0 : index
    %80 = vector.load %arg15[%c0_59, %c0_60] : memref<16x128xf32, #tpu.memory_space<vmem>>, vector<16x128xf32>
    tpu.vector_store %arg15[%c0_59, %c0_60], %79 {strides = array<i32>} : memref<16x128xf32, #tpu.memory_space<vmem>>, vector<16x128xf32>,
    return
  }
}

</mosaic_0001>

<llo_original>
// kernel: tpu_custom_call.1
$region0: #{tpu_custom_call.1}
  #allocation0 [shape = 'u32[]', space=smem, size = 0x4, offset = 0x4, fixed_abs, tag = 'smem constant byte address 0x4 - core index']
  #allocation1 [shape = 'u32[144,128]{1,0:T(1,128)}', space=vmem, size = 0x12000, scoped, tag = 'internal scratch']
  %s0 = inlined_call_operand.hbm [shape: bf16[128,128], index: 0, kind: input, shape index: {}]
  %s1 = inlined_call_operand.hbm [shape: f32[128,128], index: 1, kind: input, shape index: {}]
  %s2 = inlined_call_operand.hbm [shape: bf16[32,128], index: 2, kind: input, shape index: {}]
  %s3 = inlined_call_operand.hbm [shape: bf16[2,128,128], index: 3, kind: input, shape index: {}]
  %s4 = inlined_call_operand.vmem [shape: f32[2,1,128], index: 4, kind: input, shape index: {}]
  %s5 = inlined_call_operand.hbm [shape: bf16[2,128,128], index: 5, kind: input, shape index: {}]
  %s6 = inlined_call_operand.vmem [shape: f32[2,1,128], index: 6, kind: input, shape index: {}]
  %s7 = inlined_call_operand.hbm [shape: bf16[128,128], index: 7, kind: input, shape index: {}]
  %s8 = inlined_call_operand.vmem [shape: f32[1,128], index: 8, kind: input, shape index: {}]
  %s9 = inlined_call_operand.hbm [shape: bf16[128,128], index: 9, kind: input, shape index: {}]
  %s10 = inlined_call_operand.vmem [shape: f32[1,128], index: 10, kind: input, shape index: {}]
  %s11 = inlined_call_operand.hbm [shape: bf16[128,128], index: 11, kind: input, shape index: {}]
  %s12 = inlined_call_operand.vmem [shape: f32[1,128], index: 12, kind: input, shape index: {}]
  %s13 = inlined_call_operand.hbm [shape: bf16[128,128], index: 13, kind: input, shape index: {}]
  %s14 = inlined_call_operand.vmem [shape: f32[1,128], index: 14, kind: input, shape index: {}]
  %s15 = inlined_call_operand.hbm [shape: f32[16,128], index: 15, kind: output, shape index: {}]
  %s16 = sld [smem:[#allocation0]]
  $region106: #{tpu_custom_call.1} parent=0
    _
  %s18 = ssub.s32 1, %s16
  %s19 = scalar_select 0, %s18, %s16
  $region1: #{tpu_custom_call.1} parent=0
    #allocation2 [shape = 'u8[32768]{0}', space=vmem, size = 0x8000, scoped, tag = 'input window, operand 0, single buffered']
    #allocation3 [shape = 's32[1]{0}', space=sflag, size = 0x4, scoped, tag = 'scoped memory for tpu_custom_call.1']
    #allocation4 [shape = 's32[1]{0}', space=sflag, size = 0x4, scoped, tag = 'scoped memory for tpu_custom_call.1']
    #allocation5 [shape = 'u8[65536]{0}', space=vmem, size = 0x10000, scoped, tag = 'input window, operand 1, single buffered']
    #allocation6 [shape = 's32[1]{0}', space=sflag, size = 0x4, scoped, tag = 'scoped memory for tpu_custom_call.1']
    #allocation7 [shape = 'u8[8192]{0}', space=vmem, size = 0x2000, scoped, tag = 'input window, operand 2, single buffered']
    #allocation8 [shape = 'u8[65536]{0}', space=vmem, size = 0x10000, scoped, tag = 'input window, operand 3, single buffered']
    #allocation9 [shape = 's32[1]{0}', space=sflag, size = 0x4, scoped, tag = 'scoped memory for tpu_custom_call.1']
    #allocation10 [shape = 'u8[65536]{0}', space=vmem, size = 0x10000, scoped, tag = 'input window, operand 5, single buffered']
    #allocation11 [shape = 'u8[32768]{0}', space=vmem, size = 0x8000, scoped, tag = 'input window, operand 7, single buffered']
    #allocation12 [shape = 's32[1]{0}', space=sflag, size = 0x4, scoped, tag = 'scoped memory for tpu_custom_call.1']
    #allocation13 [shape = 'u8[32768]{0}', space=vmem, size = 0x8000, scoped, tag = 'input window, operand 9, single buffered']
    #allocation14 [shape = 'u8[32768]{0}', space=vmem, size = 0x8000, scoped, tag = 'input window, operand 11, single buffered']
    #allocation15 [shape = 's32[1]{0}', space=sflag, size = 0x4, scoped, tag = 'scoped memory for tpu_custom_call.1']
    #allocation16 [shape = 'u8[32768]{0}', space=vmem, size = 0x8000, scoped, tag = 'input window, operand 13, single buffered']
    #allocation17 [shape = 'u8[8192]{0}', space=vmem, size = 0x2000, scoped, tag = 'output window, operand 0, single buffered']
    %20 = vsyncpa [#allocation3], 0
    %21 = vsyncpa [#allocation6], 0
    %22 = vsyncpa [#allocation9], 0
    %23 = vsyncpa [#allocation12], 0
    %24 = vsyncpa [#allocation15], 0
    %25 = vsyncpa [#allocation4], 0
    // Predicated region
    $region2: #{tpu_custom_call.1} parent=1 // pred_check
      _
    $region3: #{tpu_custom_call.1} parent=1 // pred_check_branch
      %27 = sbr.rel (0) target = $region5
    $region4: #{tpu_custom_call.1} parent=1 // pred_region
      %s29 = ssub.s32 1024, 1024
      %30 = vsyncadd [#allocation3], %s29
      %s31 = sshll.u32 [#allocation2], 4
      %s32 = int_to_ptr.vmem [resolvable:$true] %s31
      %37 = dma.hbm_to_vmem [thread:$0]  %s0, 1024, %s32, [#allocation3], 64, 64, 4
    $region5: #{tpu_custom_call.1} parent=1 // pred_fallthru
      _
    // Predicated region
    $region6: #{tpu_custom_call.1} parent=1 // pred_check
      _
    $region7: #{tpu_custom_call.1} parent=1 // pred_check_branch
      %39 = sbr.rel (0) target = $region9
    $region8: #{tpu_custom_call.1} parent=1 // pred_region
      %s41 = ssub.s32 2048, 2048
      %42 = vsyncadd [#allocation6], %s41
      %s43 = sshll.u32 [#allocation5], 4
      %s44 = int_to_ptr.vmem [resolvable:$true] %s43
      %49 = dma.hbm_to_vmem [thread:$0]  %s1, 2048, %s44, [#allocation6], 128, 128, 8
    $region9: #{tpu_custom_call.1} parent=1 // pred_fallthru
      _
    // Predicated region
    $region10: #{tpu_custom_call.1} parent=1 // pred_check
      _
    $region11: #{tpu_custom_call.1} parent=1 // pred_check_branch
      %51 = sbr.rel (0) target = $region13
    $region12: #{tpu_custom_call.1} parent=1 // pred_region
      %s53 = ssub.s32 256, 256
      %54 = vsyncadd [#allocation6], %s53
      %s55 = sshll.u32 [#allocation7], 4
      %s56 = int_to_ptr.vmem [resolvable:$true] %s55
      %61 = dma.hbm_to_vmem [thread:$0]  %s2, 256, %s56, [#allocation6], 64, 64, 4
    $region13: #{tpu_custom_call.1} parent=1 // pred_fallthru
      _
    // Predicated region
    $region14: #{tpu_custom_call.1} parent=1 // pred_check
      _
    $region15: #{tpu_custom_call.1} parent=1 // pred_check_branch
      %63 = sbr.rel (0) target = $region17
    $region16: #{tpu_custom_call.1} parent=1 // pred_region
      %s65 = ssub.s32 2048, 2048
      %66 = vsyncadd [#allocation9], %s65
      %s67 = sshll.u32 [#allocation8], 4
      %s68 = int_to_ptr.vmem [resolvable:$true] %s67
      %73 = dma.hbm_to_vmem [thread:$0]  %s3, 2048, %s68, [#allocation9], 64, 64, 4
    $region17: #{tpu_custom_call.1} parent=1 // pred_fallthru
      _
    // Predicated region
    $region18: #{tpu_custom_call.1} parent=1 // pred_check
      _
    $region19: #{tpu_custom_call.1} parent=1 // pred_check_branch
      %75 = sbr.rel (0) target = $region21
    $region20: #{tpu_custom_call.1} parent=1 // pred_region
      _
    $region21: #{tpu_custom_call.1} parent=1 // pred_fallthru
      _
    // Predicated region
    $region22: #{tpu_custom_call.1} parent=1 // pred_check
      _
    $region23: #{tpu_custom_call.1} parent=1 // pred_check_branch
      %77 = sbr.rel (0) target = $region25
    $region24: #{tpu_custom_call.1} parent=1 // pred_region
      %s79 = ssub.s32 2048, 2048
      %80 = vsyncadd [#allocation9], %s79
      %s81 = sshll.u32 [#allocation10], 4
      %s82 = int_to_ptr.vmem [resolvable:$true] %s81
      %87 = dma.hbm_to_vmem [thread:$0]  %s5, 2048, %s82, [#allocation9], 64, 64, 4
    $region25: #{tpu_custom_call.1} parent=1 // pred_fallthru
      _
    // Predicated region
    $region26: #{tpu_custom_call.1} parent=1 // pred_check
      _
    $region27: #{tpu_custom_call.1} parent=1 // pred_check_branch
      %89 = sbr.rel (0) target = $region29
    $region28: #{tpu_custom_call.1} parent=1 // pred_region
      _
    $region29: #{tpu_custom_call.1} parent=1 // pred_fallthru
      _
    // Predicated region
    $region30: #{tpu_custom_call.1} parent=1 // pred_check
      _
    $region31: #{tpu_custom_call.1} parent=1 // pred_check_branch
      %91 = sbr.rel (0) target = $region33
    $region32: #{tpu_custom_call.1} parent=1 // pred_region
      %s93 = ssub.s32 1024, 1024
      %94 = vsyncadd [#allocation12], %s93
      %s95 = sshll.u32 [#allocation11], 4
      %s96 = int_to_ptr.vmem [resolvable:$true] %s95
      %101 = dma.hbm_to_vmem [thread:$0]  %s7, 1024, %s96, [#allocation12], 64, 64, 4
    $region33: #{tpu_custom_call.1} parent=1 // pred_fallthru
      _
    // Predicated region
    $region34: #{tpu_custom_call.1} parent=1 // pred_check
      _
    $region35: #{tpu_custom_call.1} parent=1 // pred_check_branch
      %103 = sbr.rel (0) target = $region37
    $region36: #{tpu_custom_call.1} parent=1 // pred_region
      _
    $region37: #{tpu_custom_call.1} parent=1 // pred_fallthru
      _
    // Predicated region
    $region38: #{tpu_custom_call.1} parent=1 // pred_check
      _
    $region39: #{tpu_custom_call.1} parent=1 // pred_check_branch
      %105 = sbr.rel (0) target = $region41
    $region40: #{tpu_custom_call.1} parent=1 // pred_region
      %s107 = ssub.s32 1024, 1024
      %108 = vsyncadd [#allocation12], %s107
      %s109 = sshll.u32 [#allocation13], 4
      %s110 = int_to_ptr.vmem [resolvable:$true] %s109
      %115 = dma.hbm_to_vmem [thread:$0]  %s9, 1024, %s110, [#allocation12], 64, 64, 4
    $region41: #{tpu_custom_call.1} parent=1 // pred_fallthru
      _
    // Predicated region
    $region42: #{tpu_custom_call.1} parent=1 // pred_check
      _
    $region43: #{tpu_custom_call.1} parent=1 // pred_check_branch
      %117 = sbr.rel (0) target = $region45
    $region44: #{tpu_custom_call.1} parent=1 // pred_region
      _
    $region45: #{tpu_custom_call.1} parent=1 // pred_fallthru
      _
    // Predicated region
    $region46: #{tpu_custom_call.1} parent=1 // pred_check
      _
    $region47: #{tpu_custom_call.1} parent=1 // pred_check_branch
      %119 = sbr.rel (0) target = $region49
    $region48: #{tpu_custom_call.1} parent=1 // pred_region
      %s121 = ssub.s32 1024, 1024
      %122 = vsyncadd [#allocation15], %s121
      %s123 = sshll.u32 [#allocation14], 4
      %s124 = int_to_ptr.vmem [resolvable:$true] %s123
      %129 = dma.hbm_to_vmem [thread:$0]  %s11, 1024, %s124, [#allocation15], 64, 64, 4
    $region49: #{tpu_custom_call.1} parent=1 // pred_fallthru
      _
    // Predicated region
    $region50: #{tpu_custom_call.1} parent=1 // pred_check
      _
    $region51: #{tpu_custom_call.1} parent=1 // pred_check_branch
      %131 = sbr.rel (0) target = $region53
    $region52: #{tpu_custom_call.1} parent=1 // pred_region
      _
    $region53: #{tpu_custom_call.1} parent=1 // pred_fallthru
      _
    // Predicated region
    $region54: #{tpu_custom_call.1} parent=1 // pred_check
      _
    $region55: #{tpu_custom_call.1} parent=1 // pred_check_branch
      %133 = sbr.rel (0) target = $region57
    $region56: #{tpu_custom_call.1} parent=1 // pred_region
      %s135 = ssub.s32 1024, 1024
      %136 = vsyncadd [#allocation15], %s135
      %s137 = sshll.u32 [#allocation16], 4
      %s138 = int_to_ptr.vmem [resolvable:$true] %s137
      %143 = dma.hbm_to_vmem [thread:$0]  %s13, 1024, %s138, [#allocation15], 64, 64, 4
    $region57: #{tpu_custom_call.1} parent=1 // pred_fallthru
      _
    // Predicated region
    $region58: #{tpu_custom_call.1} parent=1 // pred_check
      _
    $region59: #{tpu_custom_call.1} parent=1 // pred_check_branch
      %145 = sbr.rel (0) target = $region61
    $region60: #{tpu_custom_call.1} parent=1 // pred_region
      _
    $region61: #{tpu_custom_call.1} parent=1 // pred_fallthru
      _
    // Predicated region
    $region62: #{tpu_custom_call.1} parent=1 // pred_check
      _
    $region63: #{tpu_custom_call.1} parent=1 // pred_check_branch
      %147 = sbr.rel (0) target = $region65
    $region64: #{tpu_custom_call.1} parent=1 // pred_region
      %148 = dma.done [#allocation3], 1024
    $region65: #{tpu_custom_call.1} parent=1 // pred_fallthru
      _
    // Predicated region
    $region66: #{tpu_custom_call.1} parent=1 // pred_check
      _
    $region67: #{tpu_custom_call.1} parent=1 // pred_check_branch
      %150 = sbr.rel (0) target = $region69
    $region68: #{tpu_custom_call.1} parent=1 // pred_region
      %151 = dma.done [#allocation6], 2048
    $region69: #{tpu_custom_call.1} parent=1 // pred_fallthru
      _
    // Predicated region
    $region70: #{tpu_custom_call.1} parent=1 // pred_check
      _
    $region71: #{tpu_custom_call.1} parent=1 // pred_check_branch
      %153 = sbr.rel (0) target = $region73
    $region72: #{tpu_custom_call.1} parent=1 // pred_region
      %154 = dma.done [#allocation6], 256
    $region73: #{tpu_custom_call.1} parent=1 // pred_fallthru
      _
    // Predicated region
    $region74: #{tpu_custom_call.1} parent=1 // pred_check
      _
    $region75: #{tpu_custom_call.1} parent=1 // pred_check_branch
      %156 = sbr.rel (0) target = $region77
    $region76: #{tpu_custom_call.1} parent=1 // pred_region
      %157 = dma.done [#allocation9], 2048
    $region77: #{tpu_custom_call.1} parent=1 // pred_fallthru
      _
    // Predicated region
    $region78: #{tpu_custom_call.1} parent=1 // pred_check
      _
    $region79: #{tpu_custom_call.1} parent=1 // pred_check_branch
      %159 = sbr.rel (0) target = $region81
    $region80: #{tpu_custom_call.1} parent=1 // pred_region
      %160 = dma.done [#allocation9], 2048
    $region81: #{tpu_custom_call.1} parent=1 // pred_fallthru
      _
    // Predicated region
    $region82: #{tpu_custom_call.1} parent=1 // pred_check
      _
    $region83: #{tpu_custom_call.1} parent=1 // pred_check_branch
      %162 = sbr.rel (0) target = $region85
    $region84: #{tpu_custom_call.1} parent=1 // pred_region
      %163 = dma.done [#allocation12], 1024
    $region85: #{tpu_custom_call.1} parent=1 // pred_fallthru
      _
    // Predicated region
    $region86: #{tpu_custom_call.1} parent=1 // pred_check
      _
    $region87: #{tpu_custom_call.1} parent=1 // pred_check_branch
      %165 = sbr.rel (0) target = $region89
    $region88: #{tpu_custom_call.1} parent=1 // pred_region
      %166 = dma.done [#allocation12], 1024
    $region89: #{tpu_custom_call.1} parent=1 // pred_fallthru
      _
    // Predicated region
    $region90: #{tpu_custom_call.1} parent=1 // pred_check
      _
    $region91: #{tpu_custom_call.1} parent=1 // pred_check_branch
      %168 = sbr.rel (0) target = $region93
    $region92: #{tpu_custom_call.1} parent=1 // pred_region
      %169 = dma.done [#allocation15], 1024
    $region93: #{tpu_custom_call.1} parent=1 // pred_fallthru
      _
    // Predicated region
    $region94: #{tpu_custom_call.1} parent=1 // pred_check
      _
    $region95: #{tpu_custom_call.1} parent=1 // pred_check_branch
      %171 = sbr.rel (0) target = $region97
    $region96: #{tpu_custom_call.1} parent=1 // pred_region
      %172 = dma.done [#allocation15], 1024
    $region97: #{tpu_custom_call.1} parent=1 // pred_fallthru
      _
    %v174 = vld [vmem:[#allocation2] sm:$0xf]
    %v175 = vld [vmem:[#allocation2 + $0x4] sm:$0xf]
    %v176 = vld [vmem:[#allocation2 + $0x8] sm:$0xf]
    %v177 = vld [vmem:[#allocation2 + $0xc] sm:$0xf]
    %v178 = vld [vmem:[#allocation2 + $0x10] sm:$0xf]
    %v179 = vld [vmem:[#allocation2 + $0x14] sm:$0xf]
    %v180 = vld [vmem:[#allocation2 + $0x18] sm:$0xf]
    %v181 = vld [vmem:[#allocation2 + $0x1c] sm:$0xf]
    %v182 = vld [vmem:[#allocation2 + $0x20] sm:$0xf]
    %v183 = vld [vmem:[#allocation2 + $0x24] sm:$0xf]
    %v184 = vld [vmem:[#allocation2 + $0x28] sm:$0xf]
    %v185 = vld [vmem:[#allocation2 + $0x2c] sm:$0xf]
    %v186 = vld [vmem:[#allocation2 + $0x30] sm:$0xf]
    %v187 = vld [vmem:[#allocation2 + $0x34] sm:$0xf]
    %v188 = vld [vmem:[#allocation2 + $0x38] sm:$0xf]
    %v189 = vld [vmem:[#allocation2 + $0x3c] sm:$0xf]
    %v190 = vld [vmem:[#allocation5] sm:$0xff]
    %v191 = vld [vmem:[#allocation5 + $0x8] sm:$0xff]
    %v192 = vld [vmem:[#allocation5 + $0x10] sm:$0xff]
    %v193 = vld [vmem:[#allocation5 + $0x18] sm:$0xff]
    %v194 = vld [vmem:[#allocation5 + $0x20] sm:$0xff]
    %v195 = vld [vmem:[#allocation5 + $0x28] sm:$0xff]
    %v196 = vld [vmem:[#allocation5 + $0x30] sm:$0xff]
    %v197 = vld [vmem:[#allocation5 + $0x38] sm:$0xff]
    %v198 = vld [vmem:[#allocation5 + $0x40] sm:$0xff]
    %v199 = vld [vmem:[#allocation5 + $0x48] sm:$0xff]
    %v200 = vld [vmem:[#allocation5 + $0x50] sm:$0xff]
    %v201 = vld [vmem:[#allocation5 + $0x58] sm:$0xff]
    %v202 = vld [vmem:[#allocation5 + $0x60] sm:$0xff]
    %v203 = vld [vmem:[#allocation5 + $0x68] sm:$0xff]
    %v204 = vld [vmem:[#allocation5 + $0x70] sm:$0xff]
    %v205 = vld [vmem:[#allocation5 + $0x78] sm:$0xff]
    %v206 = vpack.c.bf16 %v191, %v190
    %v207 = vpack.c.bf16 %v193, %v192
    %v208 = vpack.c.bf16 %v195, %v194
    %v209 = vpack.c.bf16 %v197, %v196
    %v210 = vpack.c.bf16 %v199, %v198
    %v211 = vpack.c.bf16 %v201, %v200
    %v212 = vpack.c.bf16 %v203, %v202
    %v213 = vpack.c.bf16 %v205, %v204
    %v230 = vunpack.c.l.b16 %v174
    %v231 = vunpack.c.l.b16 %v175
    %v232 = vunpack.c.l.b16 %v176
    %v233 = vunpack.c.l.b16 %v177
    %v234 = vunpack.c.l.b16 %v178
    %v235 = vunpack.c.l.b16 %v179
    %v236 = vunpack.c.l.b16 %v180
    %v237 = vunpack.c.l.b16 %v181
    %v238 = vunpack.c.l.b16 %v182
    %v239 = vunpack.c.l.b16 %v183
    %v240 = vunpack.c.l.b16 %v184
    %v241 = vunpack.c.l.b16 %v185
    %v242 = vunpack.c.l.b16 %v186
    %v243 = vunpack.c.l.b16 %v187
    %v244 = vunpack.c.l.b16 %v188
    %v245 = vunpack.c.l.b16 %v189
    %v246 = vpack.c.b16 %v231, %v230
    %v247 = vpack.c.b16 %v233, %v232
    %v248 = vpack.c.b16 %v235, %v234
    %v249 = vpack.c.b16 %v237, %v236
    %v250 = vpack.c.b16 %v239, %v238
    %v251 = vpack.c.b16 %v241, %v240
    %v252 = vpack.c.b16 %v243, %v242
    %v253 = vpack.c.b16 %v245, %v244
    %262 = vmatprep.subr.bf16.mxu0 0
    %263 = vmatpush1.bf16.msra.mxu0 %v206
    %264 = vmatprep.subr.bf16.mxu0 0
    %265 = vmatpush1.bf16.msra.mxu0 %v207
    %266 = vmatprep.subr.bf16.mxu0 0
    %267 = vmatpush1.bf16.msra.mxu0 %v208
    %268 = vmatprep.subr.bf16.mxu0 0
    %269 = vmatpush1.bf16.msra.mxu0 %v209
    %270 = vmatprep.subr.bf16.mxu0 0
    %271 = vmatpush1.bf16.msra.mxu0 %v210
    %272 = vmatprep.subr.bf16.mxu0 0
    %273 = vmatpush1.bf16.msra.mxu0 %v211
    %274 = vmatprep.subr.bf16.mxu0 0
    %275 = vmatpush1.bf16.msra.mxu0 %v212
    %276 = vmatprep.subr.bf16.mxu0 0
    %277 = vmatpush1.bf16.msra.mxu0 %v213
    %278 = vmatprep.subr.bf16.mxu0 0
    %279 = vmatpush1.bf16.msra.mxu0 0
    %280 = vmatprep.subr.bf16.mxu0 0
    %281 = vmatpush1.bf16.msra.mxu0 0
    %282 = vmatprep.subr.bf16.mxu0 0
    %283 = vmatpush1.bf16.msra.mxu0 0
    %284 = vmatprep.subr.bf16.mxu0 0
    %285 = vmatpush1.bf16.msra.mxu0 0
    %286 = vmatprep.subr.bf16.mxu0 0
    %287 = vmatpush1.bf16.msra.mxu0 0
    %288 = vmatprep.subr.bf16.mxu0 0
    %289 = vmatpush1.bf16.msra.mxu0 0
    %290 = vmatprep.subr.bf16.mxu0 0
    %291 = vmatpush1.bf16.msra.mxu0 0
    %292 = vmatprep.subr.bf16.mxu0 0
    %293 = vmatpush1.bf16.msra.mxu0 0
    %294 = vmatprep.mubr.bf16.mxu0 0
    %295 = vmatmul.mubr.bf16.gmra.mrb[0].mxu0 %v246
    %v296 = vpop.f32.mrb[0].mxu0
    %v297 = vadd.f32 0.0, %v296
    %v298 = vpop.f32.mrb[0].mxu0
    %v299 = vpop.f32.mrb[0].mxu0
    %v300 = vadd.f32 0.0, %v299
    %v301 = vpop.f32.mrb[0].mxu0
    %302 = vmatprep.mubr.bf16.mxu0 0
    %303 = vmatmul.mubr.bf16.gmra.mrb[0].mxu0 %v247
    %v304 = vpop.f32.mrb[0].mxu0
    %v305 = vadd.f32 0.0, %v304
    %v306 = vpop.f32.mrb[0].mxu0
    %v307 = vpop.f32.mrb[0].mxu0
    %v308 = vadd.f32 0.0, %v307
    %v309 = vpop.f32.mrb[0].mxu0
    %310 = vmatprep.mubr.bf16.mxu0 0
    %311 = vmatmul.mubr.bf16.gmra.mrb[0].mxu0 %v248
    %v312 = vpop.f32.mrb[0].mxu0
    %v313 = vadd.f32 0.0, %v312
    %v314 = vpop.f32.mrb[0].mxu0
    %v315 = vpop.f32.mrb[0].mxu0
    %v316 = vadd.f32 0.0, %v315
    %v317 = vpop.f32.mrb[0].mxu0
    %318 = vmatprep.mubr.bf16.mxu0 0
    %319 = vmatmul.mubr.bf16.gmra.mrb[0].mxu0 %v249
    %v320 = vpop.f32.mrb[0].mxu0
    %v321 = vadd.f32 0.0, %v320
    %v322 = vpop.f32.mrb[0].mxu0
    %v323 = vpop.f32.mrb[0].mxu0
    %v324 = vadd.f32 0.0, %v323
    %v325 = vpop.f32.mrb[0].mxu0
    %326 = vmatprep.mubr.bf16.mxu0 0
    %327 = vmatmul.mubr.bf16.gmra.mrb[0].mxu0 %v250
    %v328 = vpop.f32.mrb[0].mxu0
    %v329 = vadd.f32 0.0, %v328
    %v330 = vpop.f32.mrb[0].mxu0
    %v331 = vpop.f32.mrb[0].mxu0
    %v332 = vadd.f32 0.0, %v331
    %v333 = vpop.f32.mrb[0].mxu0
    %334 = vmatprep.mubr.bf16.mxu0 0
    %335 = vmatmul.mubr.bf16.gmra.mrb[0].mxu0 %v251
    %v336 = vpop.f32.mrb[0].mxu0
    %v337 = vadd.f32 0.0, %v336
    %v338 = vpop.f32.mrb[0].mxu0
    %v339 = vpop.f32.mrb[0].mxu0
    %v340 = vadd.f32 0.0, %v339
    %v341 = vpop.f32.mrb[0].mxu0
    %342 = vmatprep.mubr.bf16.mxu0 0
    %343 = vmatmul.mubr.bf16.gmra.mrb[0].mxu0 %v252
    %v344 = vpop.f32.mrb[0].mxu0
    %v345 = vadd.f32 0.0, %v344
    %v346 = vpop.f32.mrb[0].mxu0
    %v347 = vpop.f32.mrb[0].mxu0
    %v348 = vadd.f32 0.0, %v347
    %v349 = vpop.f32.mrb[0].mxu0
    %350 = vmatprep.mubr.bf16.mxu0 0
    %351 = vmatmul.mubr.bf16.gmra.mrb[0].mxu0 %v253
    %v352 = vpop.f32.mrb[0].mxu0
    %v353 = vadd.f32 0.0, %v352
    %v354 = vpop.f32.mrb[0].mxu0
    %v355 = vpop.f32.mrb[0].mxu0
    %v356 = vadd.f32 0.0, %v355
    %v357 = vpop.f32.mrb[0].mxu0
    %358 = vdwg.mxu0
    %v359 = vadd.f32 %v190, %v297
    %v360 = vadd.f32 %v191, %v300
    %v361 = vadd.f32 %v192, %v305
    %v362 = vadd.f32 %v193, %v308
    %v363 = vadd.f32 %v194, %v313
    %v364 = vadd.f32 %v195, %v316
    %v365 = vadd.f32 %v196, %v321
    %v366 = vadd.f32 %v197, %v324
    %v367 = vadd.f32 %v198, %v329
    %v368 = vadd.f32 %v199, %v332
    %v369 = vadd.f32 %v200, %v337
    %v370 = vadd.f32 %v201, %v340
    %v371 = vadd.f32 %v202, %v345
    %v372 = vadd.f32 %v203, %v348
    %v373 = vadd.f32 %v204, %v353
    %v374 = vadd.f32 %v205, %v356
    %v375 = vld [vmem:[#allocation8] sm:$0xf]
    %v376 = vld [vmem:[#allocation8 + $0x4] sm:$0xf]
    %v377 = vld [vmem:[#allocation8 + $0x8] sm:$0xf]
    %v378 = vld [vmem:[#allocation8 + $0xc] sm:$0xf]
    %v379 = vld [vmem:[#allocation8 + $0x10] sm:$0xf]
    %v380 = vld [vmem:[#allocation8 + $0x14] sm:$0xf]
    %v381 = vld [vmem:[#allocation8 + $0x18] sm:$0xf]
    %v382 = vld [vmem:[#allocation8 + $0x1c] sm:$0xf]
    %v383 = vld [vmem:[#allocation8 + $0x20] sm:$0xf]
    %v384 = vld [vmem:[#allocation8 + $0x24] sm:$0xf]
    %v385 = vld [vmem:[#allocation8 + $0x28] sm:$0xf]
    %v386 = vld [vmem:[#allocation8 + $0x2c] sm:$0xf]
    %v387 = vld [vmem:[#allocation8 + $0x30] sm:$0xf]
    %v388 = vld [vmem:[#allocation8 + $0x34] sm:$0xf]
    %v389 = vld [vmem:[#allocation8 + $0x38] sm:$0xf]
    %v390 = vld [vmem:[#allocation8 + $0x3c] sm:$0xf]
    %v391 = vpack.c.bf16 %v360, %v359
    %v392 = vpack.c.bf16 %v362, %v361
    %v393 = vpack.c.bf16 %v364, %v363
    %v394 = vpack.c.bf16 %v366, %v365
    %v395 = vpack.c.bf16 %v368, %v367
    %v396 = vpack.c.bf16 %v370, %v369
    %v397 = vpack.c.bf16 %v372, %v371
    %v398 = vpack.c.bf16 %v374, %v373
    %v399 = vld [vmem:[%s4] sm:$0x1]
    %v401 = vlaneseq
    %v402 = vshrl.u32 %v401, 7
    %v403 = vsub.s32 0, %v402
    %v404 = vrot.slane %v399, %v403
    %v422 = vunpack.c.l.b16 %v375
    %v423 = vunpack.c.l.b16 %v376
    %v424 = vunpack.c.l.b16 %v377
    %v425 = vunpack.c.l.b16 %v378
    %v426 = vunpack.c.l.b16 %v379
    %v427 = vunpack.c.l.b16 %v380
    %v428 = vunpack.c.l.b16 %v381
    %v429 = vunpack.c.l.b16 %v382
    %v430 = vunpack.c.l.b16 %v383
    %v431 = vunpack.c.l.b16 %v384
    %v432 = vunpack.c.l.b16 %v385
    %v433 = vunpack.c.l.b16 %v386
    %v434 = vunpack.c.l.b16 %v387
    %v435 = vunpack.c.l.b16 %v388
    %v436 = vunpack.c.l.b16 %v389
    %v437 = vunpack.c.l.b16 %v390
    %v438 = vpack.c.b16 %v423, %v422
    %v439 = vpack.c.b16 %v425, %v424
    %v440 = vpack.c.b16 %v427, %v426
    %v441 = vpack.c.b16 %v429, %v428
    %v442 = vpack.c.b16 %v431, %v430
    %v443 = vpack.c.b16 %v433, %v432
    %v444 = vpack.c.b16 %v435, %v434
    %v445 = vpack.c.b16 %v437, %v436
    %454 = vmatprep.subr.bf16.mxu0 0
    %455 = vmatpush1.bf16.msra.mxu0 %v438
    %456 = vmatprep.subr.bf16.mxu0 0
    %457 = vmatpush1.bf16.msra.mxu0 %v439
    %458 = vmatprep.subr.bf16.mxu0 0
    %459 = vmatpush1.bf16.msra.mxu0 %v440
    %460 = vmatprep.subr.bf16.mxu0 0
    %461 = vmatpush1.bf16.msra.mxu0 %v441
    %462 = vmatprep.subr.bf16.mxu0 0
    %463 = vmatpush1.bf16.msra.mxu0 %v442
    %464 = vmatprep.subr.bf16.mxu0 0
    %465 = vmatpush1.bf16.msra.mxu0 %v443
    %466 = vmatprep.subr.bf16.mxu0 0
    %467 = vmatpush1.bf16.msra.mxu0 %v444
    %468 = vmatprep.subr.bf16.mxu0 0
    %469 = vmatpush1.bf16.msra.mxu0 %v445
    %470 = vmatprep.subr.bf16.mxu0 0
    %471 = vmatpush1.bf16.msra.mxu0 0
    %472 = vmatprep.subr.bf16.mxu0 0
    %473 = vmatpush1.bf16.msra.mxu0 0
    %474 = vmatprep.subr.bf16.mxu0 0
    %475 = vmatpush1.bf16.msra.mxu0 0
    %476 = vmatprep.subr.bf16.mxu0 0
    %477 = vmatpush1.bf16.msra.mxu0 0
    %478 = vmatprep.subr.bf16.mxu0 0
    %479 = vmatpush1.bf16.msra.mxu0 0
    %480 = vmatprep.subr.bf16.mxu0 0
    %481 = vmatpush1.bf16.msra.mxu0 0
    %482 = vmatprep.subr.bf16.mxu0 0
    %483 = vmatpush1.bf16.msra.mxu0 0
    %484 = vmatprep.subr.bf16.mxu0 0
    %485 = vmatpush1.bf16.msra.mxu0 0
    %486 = vmatprep.mubr.bf16.mxu0 0
    %487 = vmatmul.mubr.bf16.gmra.mrb[0].mxu0 %v391
    %v488 = vpop.f32.mrb[0].mxu0
    %v489 = vadd.f32 %v404, %v488
    %v490 = vpop.f32.mrb[0].mxu0
    %v491 = vpop.f32.mrb[0].mxu0
    %v492 = vadd.f32 %v404, %v491
    %v493 = vpop.f32.mrb[0].mxu0
    %494 = vmatprep.mubr.bf16.mxu0 0
    %495 = vmatmul.mubr.bf16.gmra.mrb[0].mxu0 %v392
    %v496 = vpop.f32.mrb[0].mxu0
    %v497 = vadd.f32 %v404, %v496
    %v498 = vpop.f32.mrb[0].mxu0
    %v499 = vpop.f32.mrb[0].mxu0
    %v500 = vadd.f32 %v404, %v499
    %v501 = vpop.f32.mrb[0].mxu0
    %502 = vmatprep.mubr.bf16.mxu0 0
    %503 = vmatmul.mubr.bf16.gmra.mrb[0].mxu0 %v393
    %v504 = vpop.f32.mrb[0].mxu0
    %v505 = vadd.f32 %v404, %v504
    %v506 = vpop.f32.mrb[0].mxu0
    %v507 = vpop.f32.mrb[0].mxu0
    %v508 = vadd.f32 %v404, %v507
    %v509 = vpop.f32.mrb[0].mxu0
    %510 = vmatprep.mubr.bf16.mxu0 0
    %511 = vmatmul.mubr.bf16.gmra.mrb[0].mxu0 %v394
    %v512 = vpop.f32.mrb[0].mxu0
    %v513 = vadd.f32 %v404, %v512
    %v514 = vpop.f32.mrb[0].mxu0
    %v515 = vpop.f32.mrb[0].mxu0
    %v516 = vadd.f32 %v404, %v515
    %v517 = vpop.f32.mrb[0].mxu0
    %518 = vmatprep.mubr.bf16.mxu0 0
    %519 = vmatmul.mubr.bf16.gmra.mrb[0].mxu0 %v395
    %v520 = vpop.f32.mrb[0].mxu0
    %v521 = vadd.f32 %v404, %v520
    %v522 = vpop.f32.mrb[0].mxu0
    %v523 = vpop.f32.mrb[0].mxu0
    %v524 = vadd.f32 %v404, %v523
    %v525 = vpop.f32.mrb[0].mxu0
    %526 = vmatprep.mubr.bf16.mxu0 0
    %527 = vmatmul.mubr.bf16.gmra.mrb[0].mxu0 %v396
    %v528 = vpop.f32.mrb[0].mxu0
    %v529 = vadd.f32 %v404, %v528
    %v530 = vpop.f32.mrb[0].mxu0
    %v531 = vpop.f32.mrb[0].mxu0
    %v532 = vadd.f32 %v404, %v531
    %v533 = vpop.f32.mrb[0].mxu0
    %534 = vmatprep.mubr.bf16.mxu0 0
    %535 = vmatmul.mubr.bf16.gmra.mrb[0].mxu0 %v397
    %v536 = vpop.f32.mrb[0].mxu0
    %v537 = vadd.f32 %v404, %v536
    %v538 = vpop.f32.mrb[0].mxu0
    %v539 = vpop.f32.mrb[0].mxu0
    %v540 = vadd.f32 %v404, %v539
    %v541 = vpop.f32.mrb[0].mxu0
    %542 = vmatprep.mubr.bf16.mxu0 0
    %543 = vmatmul.mubr.bf16.gmra.mrb[0].mxu0 %v398
    %v544 = vpop.f32.mrb[0].mxu0
    %v545 = vadd.f32 %v404, %v544
    %v546 = vpop.f32.mrb[0].mxu0
    %v547 = vpop.f32.mrb[0].mxu0
    %v548 = vadd.f32 %v404, %v547
    %v549 = vpop.f32.mrb[0].mxu0
    %550 = vdwg.mxu0
    %v551 = vmax.f32 %v489, 0.0
    %v552 = vmax.f32 %v492, 0.0
    %v553 = vmax.f32 %v497, 0.0
    %v554 = vmax.f32 %v500, 0.0
    %v555 = vmax.f32 %v505, 0.0
    %v556 = vmax.f32 %v508, 0.0
    %v557 = vmax.f32 %v513, 0.0
    %v558 = vmax.f32 %v516, 0.0
    %v559 = vmax.f32 %v521, 0.0
    %v560 = vmax.f32 %v524, 0.0
    %v561 = vmax.f32 %v529, 0.0
    %v562 = vmax.f32 %v532, 0.0
    %v563 = vmax.f32 %v537, 0.0
    %v564 = vmax.f32 %v540, 0.0
    %v565 = vmax.f32 %v545, 0.0
    %v566 = vmax.f32 %v548, 0.0
    %v567 = vld [vmem:[#allocation10] sm:$0xf]
    %v568 = vld [vmem:[#allocation10 + $0x4] sm:$0xf]
    %v569 = vld [vmem:[#allocation10 + $0x8] sm:$0xf]
    %v570 = vld [vmem:[#allocation10 + $0xc] sm:$0xf]
    %v571 = vld [vmem:[#allocation10 + $0x10] sm:$0xf]
    %v572 = vld [vmem:[#allocation10 + $0x14] sm:$0xf]
    %v573 = vld [vmem:[#allocation10 + $0x18] sm:$0xf]
    %v574 = vld [vmem:[#allocation10 + $0x1c] sm:$0xf]
    %v575 = vld [vmem:[#allocation10 + $0x20] sm:$0xf]
    %v576 = vld [vmem:[#allocation10 + $0x24] sm:$0xf]
    %v577 = vld [vmem:[#allocation10 + $0x28] sm:$0xf]
    %v578 = vld [vmem:[#allocation10 + $0x2c] sm:$0xf]
    %v579 = vld [vmem:[#allocation10 + $0x30] sm:$0xf]
    %v580 = vld [vmem:[#allocation10 + $0x34] sm:$0xf]
    %v581 = vld [vmem:[#allocation10 + $0x38] sm:$0xf]
    %v582 = vld [vmem:[#allocation10 + $0x3c] sm:$0xf]
    %v583 = vpack.c.bf16 %v552, %v551
    %v584 = vpack.c.bf16 %v554, %v553
    %v585 = vpack.c.bf16 %v556, %v555
    %v586 = vpack.c.bf16 %v558, %v557
    %v587 = vpack.c.bf16 %v560, %v559
    %v588 = vpack.c.bf16 %v562, %v561
    %v589 = vpack.c.bf16 %v564, %v563
    %v590 = vpack.c.bf16 %v566, %v565
    %v591 = vld [vmem:[%s6] sm:$0x1]
    %v593 = vlaneseq
    %v594 = vshrl.u32 %v593, 7
    %v595 = vsub.s32 0, %v594
    %v596 = vrot.slane %v591, %v595
    %v614 = vunpack.c.l.b16 %v567
    %v615 = vunpack.c.l.b16 %v568
    %v616 = vunpack.c.l.b16 %v569
    %v617 = vunpack.c.l.b16 %v570
    %v618 = vunpack.c.l.b16 %v571
    %v619 = vunpack.c.l.b16 %v572
    %v620 = vunpack.c.l.b16 %v573
    %v621 = vunpack.c.l.b16 %v574
    %v622 = vunpack.c.l.b16 %v575
    %v623 = vunpack.c.l.b16 %v576
    %v624 = vunpack.c.l.b16 %v577
    %v625 = vunpack.c.l.b16 %v578
    %v626 = vunpack.c.l.b16 %v579
    %v627 = vunpack.c.l.b16 %v580
    %v628 = vunpack.c.l.b16 %v581
    %v629 = vunpack.c.l.b16 %v582
    %v630 = vpack.c.b16 %v615, %v614
    %v631 = vpack.c.b16 %v617, %v616
    %v632 = vpack.c.b16 %v619, %v618
    %v633 = vpack.c.b16 %v621, %v620
    %v634 = vpack.c.b16 %v623, %v622
    %v635 = vpack.c.b16 %v625, %v624
    %v636 = vpack.c.b16 %v627, %v626
    %v637 = vpack.c.b16 %v629, %v628
    %646 = vmatprep.subr.bf16.mxu0 0
    %647 = vmatpush1.bf16.msra.mxu0 %v630
    %648 = vmatprep.subr.bf16.mxu0 0
    %649 = vmatpush1.bf16.msra.mxu0 %v631
    %650 = vmatprep.subr.bf16.mxu0 0
    %651 = vmatpush1.bf16.msra.mxu0 %v632
    %652 = vmatprep.subr.bf16.mxu0 0
    %653 = vmatpush1.bf16.msra.mxu0 %v633
    %654 = vmatprep.subr.bf16.mxu0 0
    %655 = vmatpush1.bf16.msra.mxu0 %v634
    %656 = vmatprep.subr.bf16.mxu0 0
    %657 = vmatpush1.bf16.msra.mxu0 %v635
    %658 = vmatprep.subr.bf16.mxu0 0
    %659 = vmatpush1.bf16.msra.mxu0 %v636
    %660 = vmatprep.subr.bf16.mxu0 0
    %661 = vmatpush1.bf16.msra.mxu0 %v637
    %662 = vmatprep.subr.bf16.mxu0 0
    %663 = vmatpush1.bf16.msra.mxu0 0
    %664 = vmatprep.subr.bf16.mxu0 0
    %665 = vmatpush1.bf16.msra.mxu0 0
    %666 = vmatprep.subr.bf16.mxu0 0
    %667 = vmatpush1.bf16.msra.mxu0 0
    %668 = vmatprep.subr.bf16.mxu0 0
    %669 = vmatpush1.bf16.msra.mxu0 0
    %670 = vmatprep.subr.bf16.mxu0 0
    %671 = vmatpush1.bf16.msra.mxu0 0
    %672 = vmatprep.subr.bf16.mxu0 0
    %673 = vmatpush1.bf16.msra.mxu0 0
    %674 = vmatprep.subr.bf16.mxu0 0
    %675 = vmatpush1.bf16.msra.mxu0 0
    %676 = vmatprep.subr.bf16.mxu0 0
    %677 = vmatpush1.bf16.msra.mxu0 0
    %678 = vmatprep.mubr.bf16.mxu0 0
    %679 = vmatmul.mubr.bf16.gmra.mrb[0].mxu0 %v583
    %v680 = vpop.f32.mrb[0].mxu0
    %v681 = vadd.f32 %v596, %v680
    %v682 = vpop.f32.mrb[0].mxu0
    %v683 = vpop.f32.mrb[0].mxu0
    %v684 = vadd.f32 %v596, %v683
    %v685 = vpop.f32.mrb[0].mxu0
    %686 = vmatprep.mubr.bf16.mxu0 0
    %687 = vmatmul.mubr.bf16.gmra.mrb[0].mxu0 %v584
    %v688 = vpop.f32.mrb[0].mxu0
    %v689 = vadd.f32 %v596, %v688
    %v690 = vpop.f32.mrb[0].mxu0
    %v691 = vpop.f32.mrb[0].mxu0
    %v692 = vadd.f32 %v596, %v691
    %v693 = vpop.f32.mrb[0].mxu0
    %694 = vmatprep.mubr.bf16.mxu0 0
    %695 = vmatmul.mubr.bf16.gmra.mrb[0].mxu0 %v585
    %v696 = vpop.f32.mrb[0].mxu0
    %v697 = vadd.f32 %v596, %v696
    %v698 = vpop.f32.mrb[0].mxu0
    %v699 = vpop.f32.mrb[0].mxu0
    %v700 = vadd.f32 %v596, %v699
    %v701 = vpop.f32.mrb[0].mxu0
    %702 = vmatprep.mubr.bf16.mxu0 0
    %703 = vmatmul.mubr.bf16.gmra.mrb[0].mxu0 %v586
    %v704 = vpop.f32.mrb[0].mxu0
    %v705 = vadd.f32 %v596, %v704
    %v706 = vpop.f32.mrb[0].mxu0
    %v707 = vpop.f32.mrb[0].mxu0
    %v708 = vadd.f32 %v596, %v707
    %v709 = vpop.f32.mrb[0].mxu0
    %710 = vmatprep.mubr.bf16.mxu0 0
    %711 = vmatmul.mubr.bf16.gmra.mrb[0].mxu0 %v587
    %v712 = vpop.f32.mrb[0].mxu0
    %v713 = vadd.f32 %v596, %v712
    %v714 = vpop.f32.mrb[0].mxu0
    %v715 = vpop.f32.mrb[0].mxu0
    %v716 = vadd.f32 %v596, %v715
    %v717 = vpop.f32.mrb[0].mxu0
    %718 = vmatprep.mubr.bf16.mxu0 0
    %719 = vmatmul.mubr.bf16.gmra.mrb[0].mxu0 %v588
    %v720 = vpop.f32.mrb[0].mxu0
    %v721 = vadd.f32 %v596, %v720
    %v722 = vpop.f32.mrb[0].mxu0
    %v723 = vpop.f32.mrb[0].mxu0
    %v724 = vadd.f32 %v596, %v723
    %v725 = vpop.f32.mrb[0].mxu0
    %726 = vmatprep.mubr.bf16.mxu0 0
    %727 = vmatmul.mubr.bf16.gmra.mrb[0].mxu0 %v589
    %v728 = vpop.f32.mrb[0].mxu0
    %v729 = vadd.f32 %v596, %v728
    %v730 = vpop.f32.mrb[0].mxu0
    %v731 = vpop.f32.mrb[0].mxu0
    %v732 = vadd.f32 %v596, %v731
    %v733 = vpop.f32.mrb[0].mxu0
    %734 = vmatprep.mubr.bf16.mxu0 0
    %735 = vmatmul.mubr.bf16.gmra.mrb[0].mxu0 %v590
    %v736 = vpop.f32.mrb[0].mxu0
    %v737 = vadd.f32 %v596, %v736
    %v738 = vpop.f32.mrb[0].mxu0
    %v739 = vpop.f32.mrb[0].mxu0
    %v740 = vadd.f32 %v596, %v739
    %v741 = vpop.f32.mrb[0].mxu0
    %742 = vdwg.mxu0
    %v743 = vmax.f32 %v681, 0.0
    %v744 = vmax.f32 %v684, 0.0
    %v745 = vmax.f32 %v689, 0.0
    %v746 = vmax.f32 %v692, 0.0
    %v747 = vmax.f32 %v697, 0.0
    %v748 = vmax.f32 %v700, 0.0
    %v749 = vmax.f32 %v705, 0.0
    %v750 = vmax.f32 %v708, 0.0
    %v751 = vmax.f32 %v713, 0.0
    %v752 = vmax.f32 %v716, 0.0
    %v753 = vmax.f32 %v721, 0.0
    %v754 = vmax.f32 %v724, 0.0
    %v755 = vmax.f32 %v729, 0.0
    %v756 = vmax.f32 %v732, 0.0
    %v757 = vmax.f32 %v737, 0.0
    %v758 = vmax.f32 %v740, 0.0
    %v759 = vpack.c.bf16 %v744, %v743
    %v760 = vpack.c.bf16 %v746, %v745
    %v761 = vpack.c.bf16 %v748, %v747
    %v762 = vpack.c.bf16 %v750, %v749
    %v763 = vpack.c.bf16 %v752, %v751
    %v764 = vpack.c.bf16 %v754, %v753
    %v765 = vpack.c.bf16 %v756, %v755
    %v766 = vpack.c.bf16 %v758, %v757
    %767 = vmatprep.subr.bf16.mxu0 0
    %768 = vmatpush1.bf16.msra.mxu0 %v759
    %769 = vmatprep.subr.bf16.mxu0 0
    %770 = vmatpush1.bf16.msra.mxu0 %v760
    %771 = vmatprep.subr.bf16.mxu0 0
    %772 = vmatpush1.bf16.msra.mxu0 %v761
    %773 = vmatprep.subr.bf16.mxu0 0
    %774 = vmatpush1.bf16.msra.mxu0 %v762
    %775 = vmatprep.subr.bf16.mxu0 0
    %776 = vmatpush1.bf16.msra.mxu0 %v763
    %777 = vmatprep.subr.bf16.mxu0 0
    %778 = vmatpush1.bf16.msra.mxu0 %v764
    %779 = vmatprep.subr.bf16.mxu0 0
    %780 = vmatpush1.bf16.msra.mxu0 %v765
    %781 = vmatprep.subr.bf16.mxu0 0
    %782 = vmatpush1.bf16.msra.mxu0 %v766
    %783 = vmatprep.subr.bf16.mxu0 0
    %784 = vmatpush1.bf16.msra.mxu0 0
    %785 = vmatprep.subr.bf16.mxu0 0
    %786 = vmatpush1.bf16.msra.mxu0 0
    %787 = vmatprep.subr.bf16.mxu0 0
    %788 = vmatpush1.bf16.msra.mxu0 0
    %789 = vmatprep.subr.bf16.mxu0 0
    %790 = vmatpush1.bf16.msra.mxu0 0
    %791 = vmatprep.subr.bf16.mxu0 0
    %792 = vmatpush1.bf16.msra.mxu0 0
    %793 = vmatprep.subr.bf16.mxu0 0
    %794 = vmatpush1.bf16.msra.mxu0 0
    %795 = vmatprep.subr.bf16.mxu0 0
    %796 = vmatpush1.bf16.msra.mxu0 0
    %797 = vmatprep.subr.bf16.mxu0 0
    %798 = vmatpush1.bf16.msra.mxu0 0
    %799 = vmatprep.mubr.bf16.mxu0 0
    %800 = vmatmul.mubr.bf16.gmra.mrb[0].mxu0 %v246
    %v801 = vpop.f32.mrb[0].mxu0
    %v802 = vadd.f32 0.0, %v801
    %v803 = vpop.f32.mrb[0].mxu0
    %v804 = vpop.f32.mrb[0].mxu0
    %v805 = vadd.f32 0.0, %v804
    %v806 = vpop.f32.mrb[0].mxu0
    %807 = vmatprep.mubr.bf16.mxu0 0
    %808 = vmatmul.mubr.bf16.gmra.mrb[0].mxu0 %v247
    %v809 = vpop.f32.mrb[0].mxu0
    %v810 = vadd.f32 0.0, %v809
    %v811 = vpop.f32.mrb[0].mxu0
    %v812 = vpop.f32.mrb[0].mxu0
    %v813 = vadd.f32 0.0, %v812
    %v814 = vpop.f32.mrb[0].mxu0
    %815 = vmatprep.mubr.bf16.mxu0 0
    %816 = vmatmul.mubr.bf16.gmra.mrb[0].mxu0 %v248
    %v817 = vpop.f32.mrb[0].mxu0
    %v818 = vadd.f32 0.0, %v817
    %v819 = vpop.f32.mrb[0].mxu0
    %v820 = vpop.f32.mrb[0].mxu0
    %v821 = vadd.f32 0.0, %v820
    %v822 = vpop.f32.mrb[0].mxu0
    %823 = vmatprep.mubr.bf16.mxu0 0
    %824 = vmatmul.mubr.bf16.gmra.mrb[0].mxu0 %v249
    %v825 = vpop.f32.mrb[0].mxu0
    %v826 = vadd.f32 0.0, %v825
    %v827 = vpop.f32.mrb[0].mxu0
    %v828 = vpop.f32.mrb[0].mxu0
    %v829 = vadd.f32 0.0, %v828
    %v830 = vpop.f32.mrb[0].mxu0
    %831 = vmatprep.mubr.bf16.mxu0 0
    %832 = vmatmul.mubr.bf16.gmra.mrb[0].mxu0 %v250
    %v833 = vpop.f32.mrb[0].mxu0
    %v834 = vadd.f32 0.0, %v833
    %v835 = vpop.f32.mrb[0].mxu0
    %v836 = vpop.f32.mrb[0].mxu0
    %v837 = vadd.f32 0.0, %v836
    %v838 = vpop.f32.mrb[0].mxu0
    %839 = vmatprep.mubr.bf16.mxu0 0
    %840 = vmatmul.mubr.bf16.gmra.mrb[0].mxu0 %v251
    %v841 = vpop.f32.mrb[0].mxu0
    %v842 = vadd.f32 0.0, %v841
    %v843 = vpop.f32.mrb[0].mxu0
    %v844 = vpop.f32.mrb[0].mxu0
    %v845 = vadd.f32 0.0, %v844
    %v846 = vpop.f32.mrb[0].mxu0
    %847 = vmatprep.mubr.bf16.mxu0 0
    %848 = vmatmul.mubr.bf16.gmra.mrb[0].mxu0 %v252
    %v849 = vpop.f32.mrb[0].mxu0
    %v850 = vadd.f32 0.0, %v849
    %v851 = vpop.f32.mrb[0].mxu0
    %v852 = vpop.f32.mrb[0].mxu0
    %v853 = vadd.f32 0.0, %v852
    %v854 = vpop.f32.mrb[0].mxu0
    %855 = vmatprep.mubr.bf16.mxu0 0
    %856 = vmatmul.mubr.bf16.gmra.mrb[0].mxu0 %v253
    %v857 = vpop.f32.mrb[0].mxu0
    %v858 = vadd.f32 0.0, %v857
    %v859 = vpop.f32.mrb[0].mxu0
    %v860 = vpop.f32.mrb[0].mxu0
    %v861 = vadd.f32 0.0, %v860
    %v862 = vpop.f32.mrb[0].mxu0
    %863 = vdwg.mxu0
    %v864 = vadd.f32 %v743, %v802
    %v865 = vadd.f32 %v744, %v805
    %v866 = vadd.f32 %v745, %v810
    %v867 = vadd.f32 %v746, %v813
    %v868 = vadd.f32 %v747, %v818
    %v869 = vadd.f32 %v748, %v821
    %v870 = vadd.f32 %v749, %v826
    %v871 = vadd.f32 %v750, %v829
    %v872 = vadd.f32 %v751, %v834
    %v873 = vadd.f32 %v752, %v837
    %v874 = vadd.f32 %v753, %v842
    %v875 = vadd.f32 %v754, %v845
    %v876 = vadd.f32 %v755, %v850
    %v877 = vadd.f32 %v756, %v853
    %v878 = vadd.f32 %v757, %v858
    %v879 = vadd.f32 %v758, %v861
    %s880 = scalar_lea.vmem [#allocation8], 64
    %v881 = vld [vmem:[%s880] sm:$0xf]
    %v882 = vld [vmem:[%s880 + $0x4] sm:$0xf]
    %v883 = vld [vmem:[%s880 + $0x8] sm:$0xf]
    %v884 = vld [vmem:[%s880 + $0xc] sm:$0xf]
    %v885 = vld [vmem:[%s880 + $0x10] sm:$0xf]
    %v886 = vld [vmem:[%s880 + $0x14] sm:$0xf]
    %v887 = vld [vmem:[%s880 + $0x18] sm:$0xf]
    %v888 = vld [vmem:[%s880 + $0x1c] sm:$0xf]
    %v889 = vld [vmem:[%s880 + $0x20] sm:$0xf]
    %v890 = vld [vmem:[%s880 + $0x24] sm:$0xf]
    %v891 = vld [vmem:[%s880 + $0x28] sm:$0xf]
    %v892 = vld [vmem:[%s880 + $0x2c] sm:$0xf]
    %v893 = vld [vmem:[%s880 + $0x30] sm:$0xf]
    %v894 = vld [vmem:[%s880 + $0x34] sm:$0xf]
    %v895 = vld [vmem:[%s880 + $0x38] sm:$0xf]
    %v896 = vld [vmem:[%s880 + $0x3c] sm:$0xf]
    %v897 = vpack.c.bf16 %v865, %v864
    %v898 = vpack.c.bf16 %v867, %v866
    %v899 = vpack.c.bf16 %v869, %v868
    %v900 = vpack.c.bf16 %v871, %v870
    %v901 = vpack.c.bf16 %v873, %v872
    %v902 = vpack.c.bf16 %v875, %v874
    %v903 = vpack.c.bf16 %v877, %v876
    %v904 = vpack.c.bf16 %v879, %v878
    %s905 = scalar_lea.vmem %s4, 1
    %v906 = vld [vmem:[%s905] sm:$0x1]
    %v908 = vlaneseq
    %v909 = vshrl.u32 %v908, 7
    %v910 = vsub.s32 0, %v909
    %v911 = vrot.slane %v906, %v910
    %v929 = vunpack.c.l.b16 %v881
    %v930 = vunpack.c.l.b16 %v882
    %v931 = vunpack.c.l.b16 %v883
    %v932 = vunpack.c.l.b16 %v884
    %v933 = vunpack.c.l.b16 %v885
    %v934 = vunpack.c.l.b16 %v886
    %v935 = vunpack.c.l.b16 %v887
    %v936 = vunpack.c.l.b16 %v888
    %v937 = vunpack.c.l.b16 %v889
    %v938 = vunpack.c.l.b16 %v890
    %v939 = vunpack.c.l.b16 %v891
    %v940 = vunpack.c.l.b16 %v892
    %v941 = vunpack.c.l.b16 %v893
    %v942 = vunpack.c.l.b16 %v894
    %v943 = vunpack.c.l.b16 %v895
    %v944 = vunpack.c.l.b16 %v896
    %v945 = vpack.c.b16 %v930, %v929
    %v946 = vpack.c.b16 %v932, %v931
    %v947 = vpack.c.b16 %v934, %v933
    %v948 = vpack.c.b16 %v936, %v935
    %v949 = vpack.c.b16 %v938, %v937
    %v950 = vpack.c.b16 %v940, %v939
    %v951 = vpack.c.b16 %v942, %v941
    %v952 = vpack.c.b16 %v944, %v943
    %961 = vmatprep.subr.bf16.mxu0 0
    %962 = vmatpush1.bf16.msra.mxu0 %v945
    %963 = vmatprep.subr.bf16.mxu0 0
    %964 = vmatpush1.bf16.msra.mxu0 %v946
    %965 = vmatprep.subr.bf16.mxu0 0
    %966 = vmatpush1.bf16.msra.mxu0 %v947
    %967 = vmatprep.subr.bf16.mxu0 0
    %968 = vmatpush1.bf16.msra.mxu0 %v948
    %969 = vmatprep.subr.bf16.mxu0 0
    %970 = vmatpush1.bf16.msra.mxu0 %v949
    %971 = vmatprep.subr.bf16.mxu0 0
    %972 = vmatpush1.bf16.msra.mxu0 %v950
    %973 = vmatprep.subr.bf16.mxu0 0
    %974 = vmatpush1.bf16.msra.mxu0 %v951
    %975 = vmatprep.subr.bf16.mxu0 0
    %976 = vmatpush1.bf16.msra.mxu0 %v952
    %977 = vmatprep.subr.bf16.mxu0 0
    %978 = vmatpush1.bf16.msra.mxu0 0
    %979 = vmatprep.subr.bf16.mxu0 0
    %980 = vmatpush1.bf16.msra.mxu0 0
    %981 = vmatprep.subr.bf16.mxu0 0
    %982 = vmatpush1.bf16.msra.mxu0 0
    %983 = vmatprep.subr.bf16.mxu0 0
    %984 = vmatpush1.bf16.msra.mxu0 0
    %985 = vmatprep.subr.bf16.mxu0 0
    %986 = vmatpush1.bf16.msra.mxu0 0
    %987 = vmatprep.subr.bf16.mxu0 0
    %988 = vmatpush1.bf16.msra.mxu0 0
    %989 = vmatprep.subr.bf16.mxu0 0
    %990 = vmatpush1.bf16.msra.mxu0 0
    %991 = vmatprep.subr.bf16.mxu0 0
    %992 = vmatpush1.bf16.msra.mxu0 0
    %993 = vmatprep.mubr.bf16.mxu0 0
    %994 = vmatmul.mubr.bf16.gmra.mrb[0].mxu0 %v897
    %v995 = vpop.f32.mrb[0].mxu0
    %v996 = vadd.f32 %v911, %v995
    %v997 = vpop.f32.mrb[0].mxu0
    %v998 = vpop.f32.mrb[0].mxu0
    %v999 = vadd.f32 %v911, %v998
    %v1000 = vpop.f32.mrb[0].mxu0
    %1001 = vmatprep.mubr.bf16.mxu0 0
    %1002 = vmatmul.mubr.bf16.gmra.mrb[0].mxu0 %v898
    %v1003 = vpop.f32.mrb[0].mxu0
    %v1004 = vadd.f32 %v911, %v1003
    %v1005 = vpop.f32.mrb[0].mxu0
    %v1006 = vpop.f32.mrb[0].mxu0
    %v1007 = vadd.f32 %v911, %v1006
    %v1008 = vpop.f32.mrb[0].mxu0
    %1009 = vmatprep.mubr.bf16.mxu0 0
    %1010 = vmatmul.mubr.bf16.gmra.mrb[0].mxu0 %v899
    %v1011 = vpop.f32.mrb[0].mxu0
    %v1012 = vadd.f32 %v911, %v1011
    %v1013 = vpop.f32.mrb[0].mxu0
    %v1014 = vpop.f32.mrb[0].mxu0
    %v1015 = vadd.f32 %v911, %v1014
    %v1016 = vpop.f32.mrb[0].mxu0
    %1017 = vmatprep.mubr.bf16.mxu0 0
    %1018 = vmatmul.mubr.bf16.gmra.mrb[0].mxu0 %v900
    %v1019 = vpop.f32.mrb[0].mxu0
    %v1020 = vadd.f32 %v911, %v1019
    %v1021 = vpop.f32.mrb[0].mxu0
    %v1022 = vpop.f32.mrb[0].mxu0
    %v1023 = vadd.f32 %v911, %v1022
    %v1024 = vpop.f32.mrb[0].mxu0
    %1025 = vmatprep.mubr.bf16.mxu0 0
    %1026 = vmatmul.mubr.bf16.gmra.mrb[0].mxu0 %v901
    %v1027 = vpop.f32.mrb[0].mxu0
    %v1028 = vadd.f32 %v911, %v1027
    %v1029 = vpop.f32.mrb[0].mxu0
    %v1030 = vpop.f32.mrb[0].mxu0
    %v1031 = vadd.f32 %v911, %v1030
    %v1032 = vpop.f32.mrb[0].mxu0
    %1033 = vmatprep.mubr.bf16.mxu0 0
    %1034 = vmatmul.mubr.bf16.gmra.mrb[0].mxu0 %v902
    %v1035 = vpop.f32.mrb[0].mxu0
    %v1036 = vadd.f32 %v911, %v1035
    %v1037 = vpop.f32.mrb[0].mxu0
    %v1038 = vpop.f32.mrb[0].mxu0
    %v1039 = vadd.f32 %v911, %v1038
    %v1040 = vpop.f32.mrb[0].mxu0
    %1041 = vmatprep.mubr.bf16.mxu0 0
    %1042 = vmatmul.mubr.bf16.gmra.mrb[0].mxu0 %v903
    %v1043 = vpop.f32.mrb[0].mxu0
    %v1044 = vadd.f32 %v911, %v1043
    %v1045 = vpop.f32.mrb[0].mxu0
    %v1046 = vpop.f32.mrb[0].mxu0
    %v1047 = vadd.f32 %v911, %v1046
    %v1048 = vpop.f32.mrb[0].mxu0
    %1049 = vmatprep.mubr.bf16.mxu0 0
    %1050 = vmatmul.mubr.bf16.gmra.mrb[0].mxu0 %v904
    %v1051 = vpop.f32.mrb[0].mxu0
    %v1052 = vadd.f32 %v911, %v1051
    %v1053 = vpop.f32.mrb[0].mxu0
    %v1054 = vpop.f32.mrb[0].mxu0
    %v1055 = vadd.f32 %v911, %v1054
    %v1056 = vpop.f32.mrb[0].mxu0
    %1057 = vdwg.mxu0
    %v1058 = vmax.f32 %v996, 0.0
    %v1059 = vmax.f32 %v999, 0.0
    %v1060 = vmax.f32 %v1004, 0.0
    %v1061 = vmax.f32 %v1007, 0.0
    %v1062 = vmax.f32 %v1012, 0.0
    %v1063 = vmax.f32 %v1015, 0.0
    %v1064 = vmax.f32 %v1020, 0.0
    %v1065 = vmax.f32 %v1023, 0.0
    %v1066 = vmax.f32 %v1028, 0.0
    %v1067 = vmax.f32 %v1031, 0.0
    %v1068 = vmax.f32 %v1036, 0.0
    %v1069 = vmax.f32 %v1039, 0.0
    %v1070 = vmax.f32 %v1044, 0.0
    %v1071 = vmax.f32 %v1047, 0.0
    %v1072 = vmax.f32 %v1052, 0.0
    %v1073 = vmax.f32 %v1055, 0.0
    %s1074 = scalar_lea.vmem [#allocation10], 64
    %v1075 = vld [vmem:[%s1074] sm:$0xf]
    %v1076 = vld [vmem:[%s1074 + $0x4] sm:$0xf]
    %v1077 = vld [vmem:[%s1074 + $0x8] sm:$0xf]
    %v1078 = vld [vmem:[%s1074 + $0xc] sm:$0xf]
    %v1079 = vld [vmem:[%s1074 + $0x10] sm:$0xf]
    %v1080 = vld [vmem:[%s1074 + $0x14] sm:$0xf]
    %v1081 = vld [vmem:[%s1074 + $0x18] sm:$0xf]
    %v1082 = vld [vmem:[%s1074 + $0x1c] sm:$0xf]
    %v1083 = vld [vmem:[%s1074 + $0x20] sm:$0xf]
    %v1084 = vld [vmem:[%s1074 + $0x24] sm:$0xf]
    %v1085 = vld [vmem:[%s1074 + $0x28] sm:$0xf]
    %v1086 = vld [vmem:[%s1074 + $0x2c] sm:$0xf]
    %v1087 = vld [vmem:[%s1074 + $0x30] sm:$0xf]
    %v1088 = vld [vmem:[%s1074 + $0x34] sm:$0xf]
    %v1089 = vld [vmem:[%s1074 + $0x38] sm:$0xf]
    %v1090 = vld [vmem:[%s1074 + $0x3c] sm:$0xf]
    %v1091 = vpack.c.bf16 %v1059, %v1058
    %v1092 = vpack.c.bf16 %v1061, %v1060
    %v1093 = vpack.c.bf16 %v1063, %v1062
    %v1094 = vpack.c.bf16 %v1065, %v1064
    %v1095 = vpack.c.bf16 %v1067, %v1066
    %v1096 = vpack.c.bf16 %v1069, %v1068
    %v1097 = vpack.c.bf16 %v1071, %v1070
    %v1098 = vpack.c.bf16 %v1073, %v1072
    %s1099 = scalar_lea.vmem %s6, 1
    %v1100 = vld [vmem:[%s1099] sm:$0x1]
    %v1102 = vlaneseq
    %v1103 = vshrl.u32 %v1102, 7
    %v1104 = vsub.s32 0, %v1103
    %v1105 = vrot.slane %v1100, %v1104
    %v1123 = vunpack.c.l.b16 %v1075
    %v1124 = vunpack.c.l.b16 %v1076
    %v1125 = vunpack.c.l.b16 %v1077
    %v1126 = vunpack.c.l.b16 %v1078
    %v1127 = vunpack.c.l.b16 %v1079
    %v1128 = vunpack.c.l.b16 %v1080
    %v1129 = vunpack.c.l.b16 %v1081
    %v1130 = vunpack.c.l.b16 %v1082
    %v1131 = vunpack.c.l.b16 %v1083
    %v1132 = vunpack.c.l.b16 %v1084
    %v1133 = vunpack.c.l.b16 %v1085
    %v1134 = vunpack.c.l.b16 %v1086
    %v1135 = vunpack.c.l.b16 %v1087
    %v1136 = vunpack.c.l.b16 %v1088
    %v1137 = vunpack.c.l.b16 %v1089
    %v1138 = vunpack.c.l.b16 %v1090
    %v1139 = vpack.c.b16 %v1124, %v1123
    %v1140 = vpack.c.b16 %v1126, %v1125
    %v1141 = vpack.c.b16 %v1128, %v1127
    %v1142 = vpack.c.b16 %v1130, %v1129
    %v1143 = vpack.c.b16 %v1132, %v1131
    %v1144 = vpack.c.b16 %v1134, %v1133
    %v1145 = vpack.c.b16 %v1136, %v1135
    %v1146 = vpack.c.b16 %v1138, %v1137
    %1155 = vmatprep.subr.bf16.mxu0 0
    %1156 = vmatpush1.bf16.msra.mxu0 %v1139
    %1157 = vmatprep.subr.bf16.mxu0 0
    %1158 = vmatpush1.bf16.msra.mxu0 %v1140
    %1159 = vmatprep.subr.bf16.mxu0 0
    %1160 = vmatpush1.bf16.msra.mxu0 %v1141
    %1161 = vmatprep.subr.bf16.mxu0 0
    %1162 = vmatpush1.bf16.msra.mxu0 %v1142
    %1163 = vmatprep.subr.bf16.mxu0 0
    %1164 = vmatpush1.bf16.msra.mxu0 %v1143
    %1165 = vmatprep.subr.bf16.mxu0 0
    %1166 = vmatpush1.bf16.msra.mxu0 %v1144
    %1167 = vmatprep.subr.bf16.mxu0 0
    %1168 = vmatpush1.bf16.msra.mxu0 %v1145
    %1169 = vmatprep.subr.bf16.mxu0 0
    %1170 = vmatpush1.bf16.msra.mxu0 %v1146
    %1171 = vmatprep.subr.bf16.mxu0 0
    %1172 = vmatpush1.bf16.msra.mxu0 0
    %1173 = vmatprep.subr.bf16.mxu0 0
    %1174 = vmatpush1.bf16.msra.mxu0 0
    %1175 = vmatprep.subr.bf16.mxu0 0
    %1176 = vmatpush1.bf16.msra.mxu0 0
    %1177 = vmatprep.subr.bf16.mxu0 0
    %1178 = vmatpush1.bf16.msra.mxu0 0
    %1179 = vmatprep.subr.bf16.mxu0 0
    %1180 = vmatpush1.bf16.msra.mxu0 0
    %1181 = vmatprep.subr.bf16.mxu0 0
    %1182 = vmatpush1.bf16.msra.mxu0 0
    %1183 = vmatprep.subr.bf16.mxu0 0
    %1184 = vmatpush1.bf16.msra.mxu0 0
    %1185 = vmatprep.subr.bf16.mxu0 0
    %1186 = vmatpush1.bf16.msra.mxu0 0
    %1187 = vmatprep.mubr.bf16.mxu0 0
    %1188 = vmatmul.mubr.bf16.gmra.mrb[0].mxu0 %v1091
    %v1189 = vpop.f32.mrb[0].mxu0
    %v1190 = vadd.f32 %v1105, %v1189
    %v1191 = vpop.f32.mrb[0].mxu0
    %v1192 = vpop.f32.mrb[0].mxu0
    %v1193 = vadd.f32 %v1105, %v1192
    %v1194 = vpop.f32.mrb[0].mxu0
    %1195 = vmatprep.mubr.bf16.mxu0 0
    %1196 = vmatmul.mubr.bf16.gmra.mrb[0].mxu0 %v1092
    %v1197 = vpop.f32.mrb[0].mxu0
    %v1198 = vadd.f32 %v1105, %v1197
    %v1199 = vpop.f32.mrb[0].mxu0
    %v1200 = vpop.f32.mrb[0].mxu0
    %v1201 = vadd.f32 %v1105, %v1200
    %v1202 = vpop.f32.mrb[0].mxu0
    %1203 = vmatprep.mubr.bf16.mxu0 0
    %1204 = vmatmul.mubr.bf16.gmra.mrb[0].mxu0 %v1093
    %v1205 = vpop.f32.mrb[0].mxu0
    %v1206 = vadd.f32 %v1105, %v1205
    %v1207 = vpop.f32.mrb[0].mxu0
    %v1208 = vpop.f32.mrb[0].mxu0
    %v1209 = vadd.f32 %v1105, %v1208
    %v1210 = vpop.f32.mrb[0].mxu0
    %1211 = vmatprep.mubr.bf16.mxu0 0
    %1212 = vmatmul.mubr.bf16.gmra.mrb[0].mxu0 %v1094
    %v1213 = vpop.f32.mrb[0].mxu0
    %v1214 = vadd.f32 %v1105, %v1213
    %v1215 = vpop.f32.mrb[0].mxu0
    %v1216 = vpop.f32.mrb[0].mxu0
    %v1217 = vadd.f32 %v1105, %v1216
    %v1218 = vpop.f32.mrb[0].mxu0
    %1219 = vmatprep.mubr.bf16.mxu0 0
    %1220 = vmatmul.mubr.bf16.gmra.mrb[0].mxu0 %v1095
    %v1221 = vpop.f32.mrb[0].mxu0
    %v1222 = vadd.f32 %v1105, %v1221
    %v1223 = vpop.f32.mrb[0].mxu0
    %v1224 = vpop.f32.mrb[0].mxu0
    %v1225 = vadd.f32 %v1105, %v1224
    %v1226 = vpop.f32.mrb[0].mxu0
    %1227 = vmatprep.mubr.bf16.mxu0 0
    %1228 = vmatmul.mubr.bf16.gmra.mrb[0].mxu0 %v1096
    %v1229 = vpop.f32.mrb[0].mxu0
    %v1230 = vadd.f32 %v1105, %v1229
    %v1231 = vpop.f32.mrb[0].mxu0
    %v1232 = vpop.f32.mrb[0].mxu0
    %v1233 = vadd.f32 %v1105, %v1232
    %v1234 = vpop.f32.mrb[0].mxu0
    %1235 = vmatprep.mubr.bf16.mxu0 0
    %1236 = vmatmul.mubr.bf16.gmra.mrb[0].mxu0 %v1097
    %v1237 = vpop.f32.mrb[0].mxu0
    %v1238 = vadd.f32 %v1105, %v1237
    %v1239 = vpop.f32.mrb[0].mxu0
    %v1240 = vpop.f32.mrb[0].mxu0
    %v1241 = vadd.f32 %v1105, %v1240
    %v1242 = vpop.f32.mrb[0].mxu0
    %1243 = vmatprep.mubr.bf16.mxu0 0
    %1244 = vmatmul.mubr.bf16.gmra.mrb[0].mxu0 %v1098
    %v1245 = vpop.f32.mrb[0].mxu0
    %v1246 = vadd.f32 %v1105, %v1245
    %v1247 = vpop.f32.mrb[0].mxu0
    %v1248 = vpop.f32.mrb[0].mxu0
    %v1249 = vadd.f32 %v1105, %v1248
    %v1250 = vpop.f32.mrb[0].mxu0
    %1251 = vdwg.mxu0
    %v1252 = vld [vmem:[#allocation7] sm:$0xf]
    %v1253 = vld [vmem:[#allocation7 + $0x4] sm:$0xf]
    %v1254 = vld [vmem:[#allocation7 + $0x8] sm:$0xf]
    %v1255 = vld [vmem:[#allocation7 + $0xc] sm:$0xf]
    %v1256 = vpack.c.bf16 %v1193, %v1190
    %v1257 = vpack.c.bf16 %v1201, %v1198
    %v1258 = vpack.c.bf16 %v1209, %v1206
    %v1259 = vpack.c.bf16 %v1217, %v1214
    %v1260 = vpack.c.bf16 %v1225, %v1222
    %v1261 = vpack.c.bf16 %v1233, %v1230
    %v1262 = vpack.c.bf16 %v1241, %v1238
    %v1263 = vpack.c.bf16 %v1249, %v1246
    %v1268 = vunpack.c.l.b16 %v1252
    %v1269 = vunpack.c.l.b16 %v1253
    %v1270 = vunpack.c.l.b16 %v1254
    %v1271 = vunpack.c.l.b16 %v1255
    %v1272 = vpack.c.b16 %v1269, %v1268
    %v1273 = vpack.c.b16 %v1271, %v1270
    %1276 = vmatprep.subr.bf16.mxu0 0
    %1277 = vmatpush1.bf16.msra.mxu0 %v1256
    %1278 = vmatprep.subr.bf16.mxu0 0
    %1279 = vmatpush1.bf16.msra.mxu0 %v1257
    %1280 = vmatprep.subr.bf16.mxu0 0
    %1281 = vmatpush1.bf16.msra.mxu0 %v1258
    %1282 = vmatprep.subr.bf16.mxu0 0
    %1283 = vmatpush1.bf16.msra.mxu0 %v1259
    %1284 = vmatprep.subr.bf16.mxu0 0
    %1285 = vmatpush1.bf16.msra.mxu0 %v1260
    %1286 = vmatprep.subr.bf16.mxu0 0
    %1287 = vmatpush1.bf16.msra.mxu0 %v1261
    %1288 = vmatprep.subr.bf16.mxu0 0
    %1289 = vmatpush1.bf16.msra.mxu0 %v1262
    %1290 = vmatprep.subr.bf16.mxu0 0
    %1291 = vmatpush1.bf16.msra.mxu0 %v1263
    %1292 = vmatprep.subr.bf16.mxu0 0
    %1293 = vmatpush1.bf16.msra.mxu0 0
    %1294 = vmatprep.subr.bf16.mxu0 0
    %1295 = vmatpush1.bf16.msra.mxu0 0
    %1296 = vmatprep.subr.bf16.mxu0 0
    %1297 = vmatpush1.bf16.msra.mxu0 0
    %1298 = vmatprep.subr.bf16.mxu0 0
    %1299 = vmatpush1.bf16.msra.mxu0 0
    %1300 = vmatprep.subr.bf16.mxu0 0
    %1301 = vmatpush1.bf16.msra.mxu0 0
    %1302 = vmatprep.subr.bf16.mxu0 0
    %1303 = vmatpush1.bf16.msra.mxu0 0
    %1304 = vmatprep.subr.bf16.mxu0 0
    %1305 = vmatpush1.bf16.msra.mxu0 0
    %1306 = vmatprep.subr.bf16.mxu0 0
    %1307 = vmatpush1.bf16.msra.mxu0 0
    %1308 = vmatprep.mubr.bf16.mxu0 0
    %1309 = vmatmul.mubr.bf16.gmra.mrb[0].mxu0 %v1272
    %v1310 = vpop.f32.mrb[0].mxu0
    %v1311 = vadd.f32 0.0, %v1310
    %v1312 = vpop.f32.mrb[0].mxu0
    %v1313 = vpop.f32.mrb[0].mxu0
    %v1314 = vadd.f32 0.0, %v1313
    %v1315 = vpop.f32.mrb[0].mxu0
    %1316 = vmatprep.mubr.bf16.mxu0 0
    %1317 = vmatmul.mubr.bf16.gmra.mrb[0].mxu0 %v1273
    %v1318 = vpop.f32.mrb[0].mxu0
    %v1319 = vadd.f32 0.0, %v1318
    %v1320 = vpop.f32.mrb[0].mxu0
    %v1321 = vpop.f32.mrb[0].mxu0
    %v1322 = vadd.f32 0.0, %v1321
    %v1323 = vpop.f32.mrb[0].mxu0
    %1324 = vdwg.mxu0
    %v1325 = vld [vmem:[#allocation11] sm:$0xf]
    %v1326 = vld [vmem:[#allocation11 + $0x4] sm:$0xf]
    %v1327 = vld [vmem:[#allocation11 + $0x8] sm:$0xf]
    %v1328 = vld [vmem:[#allocation11 + $0xc] sm:$0xf]
    %v1329 = vld [vmem:[#allocation11 + $0x10] sm:$0xf]
    %v1330 = vld [vmem:[#allocation11 + $0x14] sm:$0xf]
    %v1331 = vld [vmem:[#allocation11 + $0x18] sm:$0xf]
    %v1332 = vld [vmem:[#allocation11 + $0x1c] sm:$0xf]
    %v1333 = vld [vmem:[#allocation11 + $0x20] sm:$0xf]
    %v1334 = vld [vmem:[#allocation11 + $0x24] sm:$0xf]
    %v1335 = vld [vmem:[#allocation11 + $0x28] sm:$0xf]
    %v1336 = vld [vmem:[#allocation11 + $0x2c] sm:$0xf]
    %v1337 = vld [vmem:[#allocation11 + $0x30] sm:$0xf]
    %v1338 = vld [vmem:[#allocation11 + $0x34] sm:$0xf]
    %v1339 = vld [vmem:[#allocation11 + $0x38] sm:$0xf]
    %v1340 = vld [vmem:[#allocation11 + $0x3c] sm:$0xf]
    %v1341 = vpack.c.bf16 %v1314, %v1311
    %v1342 = vpack.c.bf16 %v1322, %v1319
    %v1343 = vld [vmem:[%s8] sm:$0x1]
    %v1345 = vlaneseq
    %v1346 = vshrl.u32 %v1345, 7
    %v1347 = vsub.s32 0, %v1346
    %v1348 = vrot.slane %v1343, %v1347
    %v1366 = vunpack.c.l.b16 %v1325
    %v1367 = vunpack.c.l.b16 %v1326
    %v1368 = vunpack.c.l.b16 %v1327
    %v1369 = vunpack.c.l.b16 %v1328
    %v1370 = vunpack.c.l.b16 %v1329
    %v1371 = vunpack.c.l.b16 %v1330
    %v1372 = vunpack.c.l.b16 %v1331
    %v1373 = vunpack.c.l.b16 %v1332
    %v1374 = vunpack.c.l.b16 %v1333
    %v1375 = vunpack.c.l.b16 %v1334
    %v1376 = vunpack.c.l.b16 %v1335
    %v1377 = vunpack.c.l.b16 %v1336
    %v1378 = vunpack.c.l.b16 %v1337
    %v1379 = vunpack.c.l.b16 %v1338
    %v1380 = vunpack.c.l.b16 %v1339
    %v1381 = vunpack.c.l.b16 %v1340
    %v1382 = vpack.c.b16 %v1367, %v1366
    %v1383 = vpack.c.b16 %v1369, %v1368
    %v1384 = vpack.c.b16 %v1371, %v1370
    %v1385 = vpack.c.b16 %v1373, %v1372
    %v1386 = vpack.c.b16 %v1375, %v1374
    %v1387 = vpack.c.b16 %v1377, %v1376
    %v1388 = vpack.c.b16 %v1379, %v1378
    %v1389 = vpack.c.b16 %v1381, %v1380
    %1398 = vmatprep.subr.bf16.mxu0 0
    %1399 = vmatpush1.bf16.msra.mxu0 %v1382
    %1400 = vmatprep.subr.bf16.mxu0 0
    %1401 = vmatpush1.bf16.msra.mxu0 %v1383
    %1402 = vmatprep.subr.bf16.mxu0 0
    %1403 = vmatpush1.bf16.msra.mxu0 %v1384
    %1404 = vmatprep.subr.bf16.mxu0 0
    %1405 = vmatpush1.bf16.msra.mxu0 %v1385
    %1406 = vmatprep.subr.bf16.mxu0 0
    %1407 = vmatpush1.bf16.msra.mxu0 %v1386
    %1408 = vmatprep.subr.bf16.mxu0 0
    %1409 = vmatpush1.bf16.msra.mxu0 %v1387
    %1410 = vmatprep.subr.bf16.mxu0 0
    %1411 = vmatpush1.bf16.msra.mxu0 %v1388
    %1412 = vmatprep.subr.bf16.mxu0 0
    %1413 = vmatpush1.bf16.msra.mxu0 %v1389
    %1414 = vmatprep.subr.bf16.mxu0 0
    %1415 = vmatpush1.bf16.msra.mxu0 0
    %1416 = vmatprep.subr.bf16.mxu0 0
    %1417 = vmatpush1.bf16.msra.mxu0 0
    %1418 = vmatprep.subr.bf16.mxu0 0
    %1419 = vmatpush1.bf16.msra.mxu0 0
    %1420 = vmatprep.subr.bf16.mxu0 0
    %1421 = vmatpush1.bf16.msra.mxu0 0
    %1422 = vmatprep.subr.bf16.mxu0 0
    %1423 = vmatpush1.bf16.msra.mxu0 0
    %1424 = vmatprep.subr.bf16.mxu0 0
    %1425 = vmatpush1.bf16.msra.mxu0 0
    %1426 = vmatprep.subr.bf16.mxu0 0
    %1427 = vmatpush1.bf16.msra.mxu0 0
    %1428 = vmatprep.subr.bf16.mxu0 0
    %1429 = vmatpush1.bf16.msra.mxu0 0
    %1430 = vmatprep.mubr.bf16.mxu0 0
    %1431 = vmatmul.mubr.bf16.gmra.mrb[0].mxu0 %v1341
    %v1432 = vpop.f32.mrb[0].mxu0
    %v1433 = vadd.f32 %v1348, %v1432
    %v1434 = vpop.f32.mrb[0].mxu0
    %v1435 = vpop.f32.mrb[0].mxu0
    %v1436 = vadd.f32 %v1348, %v1435
    %v1437 = vpop.f32.mrb[0].mxu0
    %1438 = vmatprep.mubr.bf16.mxu0 0
    %1439 = vmatmul.mubr.bf16.gmra.mrb[0].mxu0 %v1342
    %v1440 = vpop.f32.mrb[0].mxu0
    %v1441 = vadd.f32 %v1348, %v1440
    %v1442 = vpop.f32.mrb[0].mxu0
    %v1443 = vpop.f32.mrb[0].mxu0
    %v1444 = vadd.f32 %v1348, %v1443
    %v1445 = vpop.f32.mrb[0].mxu0
    %1446 = vdwg.mxu0
    %v1447 = vmax.f32 %v1433, 0.0
    %v1448 = vmax.f32 %v1436, 0.0
    %v1449 = vmax.f32 %v1441, 0.0
    %v1450 = vmax.f32 %v1444, 0.0
    %v1451 = vld [vmem:[#allocation13] sm:$0xf]
    %v1452 = vld [vmem:[#allocation13 + $0x4] sm:$0xf]
    %v1453 = vld [vmem:[#allocation13 + $0x8] sm:$0xf]
    %v1454 = vld [vmem:[#allocation13 + $0xc] sm:$0xf]
    %v1455 = vld [vmem:[#allocation13 + $0x10] sm:$0xf]
    %v1456 = vld [vmem:[#allocation13 + $0x14] sm:$0xf]
    %v1457 = vld [vmem:[#allocation13 + $0x18] sm:$0xf]
    %v1458 = vld [vmem:[#allocation13 + $0x1c] sm:$0xf]
    %v1459 = vld [vmem:[#allocation13 + $0x20] sm:$0xf]
    %v1460 = vld [vmem:[#allocation13 + $0x24] sm:$0xf]
    %v1461 = vld [vmem:[#allocation13 + $0x28] sm:$0xf]
    %v1462 = vld [vmem:[#allocation13 + $0x2c] sm:$0xf]
    %v1463 = vld [vmem:[#allocation13 + $0x30] sm:$0xf]
    %v1464 = vld [vmem:[#allocation13 + $0x34] sm:$0xf]
    %v1465 = vld [vmem:[#allocation13 + $0x38] sm:$0xf]
    %v1466 = vld [vmem:[#allocation13 + $0x3c] sm:$0xf]
    %v1467 = vpack.c.bf16 %v1448, %v1447
    %v1468 = vpack.c.bf16 %v1450, %v1449
    %v1469 = vld [vmem:[%s10] sm:$0x1]
    %v1471 = vlaneseq
    %v1472 = vshrl.u32 %v1471, 7
    %v1473 = vsub.s32 0, %v1472
    %v1474 = vrot.slane %v1469, %v1473
    %v1492 = vunpack.c.l.b16 %v1451
    %v1493 = vunpack.c.l.b16 %v1452
    %v1494 = vunpack.c.l.b16 %v1453
    %v1495 = vunpack.c.l.b16 %v1454
    %v1496 = vunpack.c.l.b16 %v1455
    %v1497 = vunpack.c.l.b16 %v1456
    %v1498 = vunpack.c.l.b16 %v1457
    %v1499 = vunpack.c.l.b16 %v1458
    %v1500 = vunpack.c.l.b16 %v1459
    %v1501 = vunpack.c.l.b16 %v1460
    %v1502 = vunpack.c.l.b16 %v1461
    %v1503 = vunpack.c.l.b16 %v1462
    %v1504 = vunpack.c.l.b16 %v1463
    %v1505 = vunpack.c.l.b16 %v1464
    %v1506 = vunpack.c.l.b16 %v1465
    %v1507 = vunpack.c.l.b16 %v1466
    %v1508 = vpack.c.b16 %v1493, %v1492
    %v1509 = vpack.c.b16 %v1495, %v1494
    %v1510 = vpack.c.b16 %v1497, %v1496
    %v1511 = vpack.c.b16 %v1499, %v1498
    %v1512 = vpack.c.b16 %v1501, %v1500
    %v1513 = vpack.c.b16 %v1503, %v1502
    %v1514 = vpack.c.b16 %v1505, %v1504
    %v1515 = vpack.c.b16 %v1507, %v1506
    %1524 = vmatprep.subr.bf16.mxu0 0
    %1525 = vmatpush1.bf16.msra.mxu0 %v1508
    %1526 = vmatprep.subr.bf16.mxu0 0
    %1527 = vmatpush1.bf16.msra.mxu0 %v1509
    %1528 = vmatprep.subr.bf16.mxu0 0
    %1529 = vmatpush1.bf16.msra.mxu0 %v1510
    %1530 = vmatprep.subr.bf16.mxu0 0
    %1531 = vmatpush1.bf16.msra.mxu0 %v1511
    %1532 = vmatprep.subr.bf16.mxu0 0
    %1533 = vmatpush1.bf16.msra.mxu0 %v1512
    %1534 = vmatprep.subr.bf16.mxu0 0
    %1535 = vmatpush1.bf16.msra.mxu0 %v1513
    %1536 = vmatprep.subr.bf16.mxu0 0
    %1537 = vmatpush1.bf16.msra.mxu0 %v1514
    %1538 = vmatprep.subr.bf16.mxu0 0
    %1539 = vmatpush1.bf16.msra.mxu0 %v1515
    %1540 = vmatprep.subr.bf16.mxu0 0
    %1541 = vmatpush1.bf16.msra.mxu0 0
    %1542 = vmatprep.subr.bf16.mxu0 0
    %1543 = vmatpush1.bf16.msra.mxu0 0
    %1544 = vmatprep.subr.bf16.mxu0 0
    %1545 = vmatpush1.bf16.msra.mxu0 0
    %1546 = vmatprep.subr.bf16.mxu0 0
    %1547 = vmatpush1.bf16.msra.mxu0 0
    %1548 = vmatprep.subr.bf16.mxu0 0
    %1549 = vmatpush1.bf16.msra.mxu0 0
    %1550 = vmatprep.subr.bf16.mxu0 0
    %1551 = vmatpush1.bf16.msra.mxu0 0
    %1552 = vmatprep.subr.bf16.mxu0 0
    %1553 = vmatpush1.bf16.msra.mxu0 0
    %1554 = vmatprep.subr.bf16.mxu0 0
    %1555 = vmatpush1.bf16.msra.mxu0 0
    %1556 = vmatprep.mubr.bf16.mxu0 0
    %1557 = vmatmul.mubr.bf16.gmra.mrb[0].mxu0 %v1467
    %v1558 = vpop.f32.mrb[0].mxu0
    %v1559 = vadd.f32 %v1474, %v1558
    %v1560 = vpop.f32.mrb[0].mxu0
    %v1561 = vpop.f32.mrb[0].mxu0
    %v1562 = vadd.f32 %v1474, %v1561
    %v1563 = vpop.f32.mrb[0].mxu0
    %1564 = vmatprep.mubr.bf16.mxu0 0
    %1565 = vmatmul.mubr.bf16.gmra.mrb[0].mxu0 %v1468
    %v1566 = vpop.f32.mrb[0].mxu0
    %v1567 = vadd.f32 %v1474, %v1566
    %v1568 = vpop.f32.mrb[0].mxu0
    %v1569 = vpop.f32.mrb[0].mxu0
    %v1570 = vadd.f32 %v1474, %v1569
    %v1571 = vpop.f32.mrb[0].mxu0
    %1572 = vdwg.mxu0
    %v1573 = vmul.f32 %v1559, %v1567
    %v1574 = vmul.f32 %v1562, %v1570
    %v1575 = vld [vmem:[#allocation14] sm:$0xf]
    %v1576 = vld [vmem:[#allocation14 + $0x4] sm:$0xf]
    %v1577 = vld [vmem:[#allocation14 + $0x8] sm:$0xf]
    %v1578 = vld [vmem:[#allocation14 + $0xc] sm:$0xf]
    %v1579 = vld [vmem:[#allocation14 + $0x10] sm:$0xf]
    %v1580 = vld [vmem:[#allocation14 + $0x14] sm:$0xf]
    %v1581 = vld [vmem:[#allocation14 + $0x18] sm:$0xf]
    %v1582 = vld [vmem:[#allocation14 + $0x1c] sm:$0xf]
    %v1583 = vld [vmem:[#allocation14 + $0x20] sm:$0xf]
    %v1584 = vld [vmem:[#allocation14 + $0x24] sm:$0xf]
    %v1585 = vld [vmem:[#allocation14 + $0x28] sm:$0xf]
    %v1586 = vld [vmem:[#allocation14 + $0x2c] sm:$0xf]
    %v1587 = vld [vmem:[#allocation14 + $0x30] sm:$0xf]
    %v1588 = vld [vmem:[#allocation14 + $0x34] sm:$0xf]
    %v1589 = vld [vmem:[#allocation14 + $0x38] sm:$0xf]
    %v1590 = vld [vmem:[#allocation14 + $0x3c] sm:$0xf]
    %v1591 = vpack.c.bf16 %v1574, %v1573
    %v1592 = vld [vmem:[%s12] sm:$0x1]
    %v1594 = vlaneseq
    %v1595 = vshrl.u32 %v1594, 7
    %v1596 = vsub.s32 0, %v1595
    %v1597 = vrot.slane %v1592, %v1596
    %v1615 = vunpack.c.l.b16 %v1575
    %v1616 = vunpack.c.l.b16 %v1576
    %v1617 = vunpack.c.l.b16 %v1577
    %v1618 = vunpack.c.l.b16 %v1578
    %v1619 = vunpack.c.l.b16 %v1579
    %v1620 = vunpack.c.l.b16 %v1580
    %v1621 = vunpack.c.l.b16 %v1581
    %v1622 = vunpack.c.l.b16 %v1582
    %v1623 = vunpack.c.l.b16 %v1583
    %v1624 = vunpack.c.l.b16 %v1584
    %v1625 = vunpack.c.l.b16 %v1585
    %v1626 = vunpack.c.l.b16 %v1586
    %v1627 = vunpack.c.l.b16 %v1587
    %v1628 = vunpack.c.l.b16 %v1588
    %v1629 = vunpack.c.l.b16 %v1589
    %v1630 = vunpack.c.l.b16 %v1590
    %v1631 = vpack.c.b16 %v1616, %v1615
    %v1632 = vpack.c.b16 %v1618, %v1617
    %v1633 = vpack.c.b16 %v1620, %v1619
    %v1634 = vpack.c.b16 %v1622, %v1621
    %v1635 = vpack.c.b16 %v1624, %v1623
    %v1636 = vpack.c.b16 %v1626, %v1625
    %v1637 = vpack.c.b16 %v1628, %v1627
    %v1638 = vpack.c.b16 %v1630, %v1629
    %1647 = vmatprep.subr.bf16.mxu0 0
    %1648 = vmatpush1.bf16.msra.mxu0 %v1631
    %1649 = vmatprep.subr.bf16.mxu0 0
    %1650 = vmatpush1.bf16.msra.mxu0 %v1632
    %1651 = vmatprep.subr.bf16.mxu0 0
    %1652 = vmatpush1.bf16.msra.mxu0 %v1633
    %1653 = vmatprep.subr.bf16.mxu0 0
    %1654 = vmatpush1.bf16.msra.mxu0 %v1634
    %1655 = vmatprep.subr.bf16.mxu0 0
    %1656 = vmatpush1.bf16.msra.mxu0 %v1635
    %1657 = vmatprep.subr.bf16.mxu0 0
    %1658 = vmatpush1.bf16.msra.mxu0 %v1636
    %1659 = vmatprep.subr.bf16.mxu0 0
    %1660 = vmatpush1.bf16.msra.mxu0 %v1637
    %1661 = vmatprep.subr.bf16.mxu0 0
    %1662 = vmatpush1.bf16.msra.mxu0 %v1638
    %1663 = vmatprep.subr.bf16.mxu0 0
    %1664 = vmatpush1.bf16.msra.mxu0 0
    %1665 = vmatprep.subr.bf16.mxu0 0
    %1666 = vmatpush1.bf16.msra.mxu0 0
    %1667 = vmatprep.subr.bf16.mxu0 0
    %1668 = vmatpush1.bf16.msra.mxu0 0
    %1669 = vmatprep.subr.bf16.mxu0 0
    %1670 = vmatpush1.bf16.msra.mxu0 0
    %1671 = vmatprep.subr.bf16.mxu0 0
    %1672 = vmatpush1.bf16.msra.mxu0 0
    %1673 = vmatprep.subr.bf16.mxu0 0
    %1674 = vmatpush1.bf16.msra.mxu0 0
    %1675 = vmatprep.subr.bf16.mxu0 0
    %1676 = vmatpush1.bf16.msra.mxu0 0
    %1677 = vmatprep.subr.bf16.mxu0 0
    %1678 = vmatpush1.bf16.msra.mxu0 0
    %1679 = vmatprep.mubr.bf16.mxu0 0
    %1680 = vmatmul.mubr.bf16.gmra.mrb[0].mxu0 %v1591
    %v1681 = vpop.f32.mrb[0].mxu0
    %v1682 = vadd.f32 %v1597, %v1681
    %v1683 = vpop.f32.mrb[0].mxu0
    %v1684 = vpop.f32.mrb[0].mxu0
    %v1685 = vadd.f32 %v1597, %v1684
    %v1686 = vpop.f32.mrb[0].mxu0
    %1687 = vdwg.mxu0
    %v1688 = vmax.f32 %v1682, 0.0
    %v1689 = vmax.f32 %v1685, 0.0
    %v1690 = vld [vmem:[#allocation16] sm:$0xf]
    %v1691 = vld [vmem:[#allocation16 + $0x4] sm:$0xf]
    %v1692 = vld [vmem:[#allocation16 + $0x8] sm:$0xf]
    %v1693 = vld [vmem:[#allocation16 + $0xc] sm:$0xf]
    %v1694 = vld [vmem:[#allocation16 + $0x10] sm:$0xf]
    %v1695 = vld [vmem:[#allocation16 + $0x14] sm:$0xf]
    %v1696 = vld [vmem:[#allocation16 + $0x18] sm:$0xf]
    %v1697 = vld [vmem:[#allocation16 + $0x1c] sm:$0xf]
    %v1698 = vld [vmem:[#allocation16 + $0x20] sm:$0xf]
    %v1699 = vld [vmem:[#allocation16 + $0x24] sm:$0xf]
    %v1700 = vld [vmem:[#allocation16 + $0x28] sm:$0xf]
    %v1701 = vld [vmem:[#allocation16 + $0x2c] sm:$0xf]
    %v1702 = vld [vmem:[#allocation16 + $0x30] sm:$0xf]
    %v1703 = vld [vmem:[#allocation16 + $0x34] sm:$0xf]
    %v1704 = vld [vmem:[#allocation16 + $0x38] sm:$0xf]
    %v1705 = vld [vmem:[#allocation16 + $0x3c] sm:$0xf]
    %v1706 = vpack.c.bf16 %v1689, %v1688
    %v1707 = vld [vmem:[%s14] sm:$0x1]
    %v1709 = vlaneseq
    %v1710 = vshrl.u32 %v1709, 7
    %v1711 = vsub.s32 0, %v1710
    %v1712 = vrot.slane %v1707, %v1711
    %v1730 = vunpack.c.l.b16 %v1690
    %v1731 = vunpack.c.l.b16 %v1691
    %v1732 = vunpack.c.l.b16 %v1692
    %v1733 = vunpack.c.l.b16 %v1693
    %v1734 = vunpack.c.l.b16 %v1694
    %v1735 = vunpack.c.l.b16 %v1695
    %v1736 = vunpack.c.l.b16 %v1696
    %v1737 = vunpack.c.l.b16 %v1697
    %v1738 = vunpack.c.l.b16 %v1698
    %v1739 = vunpack.c.l.b16 %v1699
    %v1740 = vunpack.c.l.b16 %v1700
    %v1741 = vunpack.c.l.b16 %v1701
    %v1742 = vunpack.c.l.b16 %v1702
    %v1743 = vunpack.c.l.b16 %v1703
    %v1744 = vunpack.c.l.b16 %v1704
    %v1745 = vunpack.c.l.b16 %v1705
    %v1746 = vpack.c.b16 %v1731, %v1730
    %v1747 = vpack.c.b16 %v1733, %v1732
    %v1748 = vpack.c.b16 %v1735, %v1734
    %v1749 = vpack.c.b16 %v1737, %v1736
    %v1750 = vpack.c.b16 %v1739, %v1738
    %v1751 = vpack.c.b16 %v1741, %v1740
    %v1752 = vpack.c.b16 %v1743, %v1742
    %v1753 = vpack.c.b16 %v1745, %v1744
    %1762 = vmatprep.subr.bf16.mxu0 0
    %1763 = vmatpush1.bf16.msra.mxu0 %v1746
    %1764 = vmatprep.subr.bf16.mxu0 0
    %1765 = vmatpush1.bf16.msra.mxu0 %v1747
    %1766 = vmatprep.subr.bf16.mxu0 0
    %1767 = vmatpush1.bf16.msra.mxu0 %v1748
    %1768 = vmatprep.subr.bf16.mxu0 0
    %1769 = vmatpush1.bf16.msra.mxu0 %v1749
    %1770 = vmatprep.subr.bf16.mxu0 0
    %1771 = vmatpush1.bf16.msra.mxu0 %v1750
    %1772 = vmatprep.subr.bf16.mxu0 0
    %1773 = vmatpush1.bf16.msra.mxu0 %v1751
    %1774 = vmatprep.subr.bf16.mxu0 0
    %1775 = vmatpush1.bf16.msra.mxu0 %v1752
    %1776 = vmatprep.subr.bf16.mxu0 0
    %1777 = vmatpush1.bf16.msra.mxu0 %v1753
    %1778 = vmatprep.subr.bf16.mxu0 0
    %1779 = vmatpush1.bf16.msra.mxu0 0
    %1780 = vmatprep.subr.bf16.mxu0 0
    %1781 = vmatpush1.bf16.msra.mxu0 0
    %1782 = vmatprep.subr.bf16.mxu0 0
    %1783 = vmatpush1.bf16.msra.mxu0 0
    %1784 = vmatprep.subr.bf16.mxu0 0
    %1785 = vmatpush1.bf16.msra.mxu0 0
    %1786 = vmatprep.subr.bf16.mxu0 0
    %1787 = vmatpush1.bf16.msra.mxu0 0
    %1788 = vmatprep.subr.bf16.mxu0 0
    %1789 = vmatpush1.bf16.msra.mxu0 0
    %1790 = vmatprep.subr.bf16.mxu0 0
    %1791 = vmatpush1.bf16.msra.mxu0 0
    %1792 = vmatprep.subr.bf16.mxu0 0
    %1793 = vmatpush1.bf16.msra.mxu0 0
    %1794 = vmatprep.mubr.bf16.mxu0 0
    %1795 = vmatmul.mubr.bf16.gmra.mrb[0].mxu0 %v1706
    %v1796 = vpop.f32.mrb[0].mxu0
    %v1797 = vadd.f32 %v1712, %v1796
    %v1798 = vpop.f32.mrb[0].mxu0
    %v1799 = vpop.f32.mrb[0].mxu0
    %v1800 = vadd.f32 %v1712, %v1799
    %v1801 = vpop.f32.mrb[0].mxu0
    %1802 = vdwg.mxu0
    %1803 = vst [vmem:[#allocation17] sm:$0xff] %v1797
    %1804 = vst [vmem:[#allocation17 + $0x8] sm:$0xff] %v1800
    // Predicated region
    $region98: #{tpu_custom_call.1} parent=1 // pred_check
      _
    $region99: #{tpu_custom_call.1} parent=1 // pred_check_branch
      %1806 = sbr.rel (0) target = $region101
    $region100: #{tpu_custom_call.1} parent=1 // pred_region
      %s1808 = ssub.s32 256, 256
      %1809 = vsyncadd [#allocation4], %s1808
      %s1810 = sshll.u32 [#allocation17], 4
      %s1811 = int_to_ptr.vmem [resolvable:$true] %s1810
      %1816 = dma.vmem_to_hbm [thread:$0]  %s1811, 256, %s15, [#allocation4], 128, 128, 8
    $region101: #{tpu_custom_call.1} parent=1 // pred_fallthru
      _
    // Predicated region
    $region102: #{tpu_custom_call.1} parent=1 // pred_check
      _
    $region103: #{tpu_custom_call.1} parent=1 // pred_check_branch
      %1818 = sbr.rel (0) target = $region105
    $region104: #{tpu_custom_call.1} parent=1 // pred_region
      %1819 = dma.done [#allocation4], 256
    $region105: #{tpu_custom_call.1} parent=1 // pred_fallthru
      _
    %1820 = vsyncpa [#allocation3], 1
    %1821 = vsyncpa [#allocation6], 1
    %1822 = vsyncpa [#allocation9], 1
    %1823 = vsyncpa [#allocation12], 1
    %1824 = vsyncpa [#allocation15], 1
    %1825 = vsyncpa [#allocation4], 1

</llo_original>
